<compile_context>
chip_gen: v6e
topology: v6e:2x2x1
jax: 0.10.0
libtpu: 0.0.40
codegen_flags: <defaults>
</compile_context>

<pallas_src>
import functools

import jax
import jax.numpy as jnp
from jax.experimental import pallas as pl
from jax.experimental.pallas import tpu as pltpu

LANE = 128


def _round_up(v, m):
    return ((v + m - 1) // m) * m


# ----------------------------------------------------------------------------
# Fused Pallas kernel: the entire GraphConv stack for one graph.
# ----------------------------------------------------------------------------
def fused_graph_attention_kernel(x_ref, adj_ref, w_ref, a_src_ref, a_dst_ref,
                                 b_ref, x_out_ref, c_out_ref, *,
                                 neg_slope, skip_flags, attn_cols):
    x = x_ref[0]                        # (N_pad, F_pad) f32, resident across layers
    mask = adj_ref[0] != 0              # (N_pad, N_pad) bool, hoisted once, reused
    n_layers = len(skip_flags)
    neg_big = jnp.float32(-1e30)        # large finite negative (robust masking)

    for l in range(n_layers):           # static unroll over layers (L is small)
        # Linear transform on the MXU in bf16 with f32 accumulation.
        h = jnp.dot(x.astype(jnp.bfloat16), w_ref[l],
                    preferred_element_type=jnp.float32)        # (N_pad, F_pad) f32

        # Attention scores: folded into W's padded columns when possible
        # (free MXU columns), otherwise VPU multiply + lane reduce.
        src_col, dst_col = attn_cols[l]
        if src_col >= 0:
            f_src = h[:, src_col:src_col + 1]                    # (N_pad, 1)
            f_dst = h[:, dst_col:dst_col + 1]                    # (N_pad, 1)
        else:
            f_src = jnp.sum(h * a_src_ref[l], axis=-1, keepdims=True)
            f_dst = jnp.sum(h * a_dst_ref[l], axis=-1, keepdims=True)

        e = f_src + f_dst.T                                      # (N_pad, N_pad)
        e = jnp.where(e > 0, e, neg_slope * e)                   # LeakyReLU
        e = jnp.where(mask, e, neg_big)                          # adjacency mask

        # Row-wise numerically-stable softmax; fused masking, robust to
        # fully-masked (padded) rows.
        e_max = jnp.max(e, axis=-1, keepdims=True)
        p = jnp.where(mask, jnp.exp(e - e_max), 0.0)
        denom = jnp.sum(p, axis=-1, keepdims=True)
        denom = jnp.where(denom > 0, denom, 1.0)
        c = p * pl.reciprocal(denom)                             # exact reciprocal

        c_bf16 = c.astype(jnp.bfloat16)
        c_out_ref[0, l] = c_bf16                                 # bf16 writeback

        # Aggregate neighbours (bf16 MXU, f32 accumulate) and add bias.
        out = jnp.dot(c_bf16, h.astype(jnp.bfloat16),
                      preferred_element_type=jnp.float32) + b_ref[l]

        # Skip connection (when in/out feature dims match), then ReLU glue layer.
        x = (x + out) if skip_flags[l] else out
        if l != n_layers - 1:
            x = jnp.maximum(x, 0.0)

    x_out_ref[0] = x.astype(x_out_ref.dtype)


# ----------------------------------------------------------------------------
# Wrapper: pad to lane-dense shapes, stack params, one pallas_call per batch.
# ----------------------------------------------------------------------------
def graph_attention_forward(x, adj, params, *, skip_connection=True,
                            neg_slope=0.2):
    """Mirrors GraphAttention.forward: returns (x, [C_1, ..., C_L]).

    x:   (N, F_in) or (B, N, F_in) node features.
    adj: (N, N)   or (B, N, N)    adjacency mask (nonzero = edge).
    """
    squeeze_batch = (x.ndim == 2)
    if squeeze_batch:
        x = x[None]
        adj = adj[None]

    b_sz, n, f_in = x.shape
    n_layers = len(params)
    feat_dims = [f_in] + [int(p["w"].shape[1]) for p in params]
    f_pad = _round_up(max(feat_dims), LANE)
    n_pad = _round_up(n, LANE)

    # Stack & zero-pad parameters so every layer shares one (F_pad, F_pad) slot.
    # Fold W@a_src / W@a_dst into two free padded columns of W when F_out + 2
    # fits, so the attention projections ride the existing X@W matmul.
    w_stack = jnp.zeros((n_layers, f_pad, f_pad), jnp.float32)
    a_src_stack = jnp.zeros((n_layers, 1, f_pad), jnp.float32)
    a_dst_stack = jnp.zeros((n_layers, 1, f_pad), jnp.float32)
    b_stack = jnp.zeros((n_layers, 1, f_pad), jnp.float32)
    attn_cols = []
    for l, p in enumerate(params):
        fi, fo = p["w"].shape
        w = p["w"].astype(jnp.float32)
        a_s = p["a_src"].reshape(-1).astype(jnp.float32)
        a_d = p["a_dst"].reshape(-1).astype(jnp.float32)
        w_stack = w_stack.at[l, :fi, :fo].set(w)
        a_src_stack = a_src_stack.at[l, 0, :fo].set(a_s)
        a_dst_stack = a_dst_stack.at[l, 0, :fo].set(a_d)
        b_stack = b_stack.at[l, 0, :fo].set(
            p["b"].reshape(-1).astype(jnp.float32))
        if fo + 2 <= f_pad:                      # free padded columns available
            w_stack = w_stack.at[l, :fi, fo].set(w @ a_s)
            w_stack = w_stack.at[l, :fi, fo + 1].set(w @ a_d)
            attn_cols.append((fo, fo + 1))
        else:                                    # fallback: VPU reduce in-kernel
            attn_cols.append((-1, -1))
    w_stack = w_stack.astype(jnp.bfloat16)       # bf16 weight DMA / MXU operand
    attn_cols = tuple(attn_cols)

    # Zero-pad activations/adjacency (pad rows/cols are masked out, stay inert).
    x_p = jnp.zeros((b_sz, n_pad, f_pad), jnp.float32)
    x_p = x_p.at[:, :n, :f_in].set(x.astype(jnp.float32))
    adj_p = jnp.zeros((b_sz, n_pad, n_pad), jnp.int8)
    adj_p = adj_p.at[:, :n, :n].set((adj != 0).astype(jnp.int8))

    skip_flags = tuple(
        bool(skip_connection and p["w"].shape[0] == p["w"].shape[1])
        for p in params)

    kernel = functools.partial(fused_graph_attention_kernel,
                               neg_slope=neg_slope, skip_flags=skip_flags,
                               attn_cols=attn_cols)

    # VMEM budget: 2x (double-buffered) pipelined blocks + in-kernel temporaries,
    # capped below the physical per-core VMEM (leave compiler scratch headroom).
    pipelined_bytes = (
        n_pad * f_pad * 4                         # x input block (f32)
        + n_pad * n_pad * 1                       # adj block (int8)
        + n_layers * f_pad * f_pad * 2            # stacked W (bf16)
        + 3 * n_layers * f_pad * 4                # a_src / a_dst / bias (f32)
        + n_pad * f_pad * 4                       # x output block (f32)
        + n_layers * n_pad * n_pad * 2)           # C output block (bf16)
    temp_bytes = (
        3 * n_pad * n_pad * 4                     # e / p / c f32 live set
        + n_pad * n_pad * 2                       # c bf16 operand
        + 3 * n_pad * f_pad * 4                   # x / h / out f32
        + 2 * n_pad * f_pad * 2)                  # bf16 matmul operands
    need = 2 * pipelined_bytes + temp_bytes + (4 << 20)
    try:
        vmem_cap = getattr(pltpu.get_tpu_info(), "vmem_capacity_bytes", 0) \
            or (128 << 20)
    except Exception:  # pragma: no cover - hardware query best-effort
        vmem_cap = 128 << 20
    vmem_limit = int(min(int(0.85 * vmem_cap), max(32 << 20, need)))

    x_out, c_out = pl.pallas_call(
        kernel,
        out_shape=(
            jax.ShapeDtypeStruct((b_sz, n_pad, f_pad), jnp.float32),
            jax.ShapeDtypeStruct((b_sz, n_layers, n_pad, n_pad), jnp.bfloat16),
        ),
        grid=(b_sz,),
        in_specs=[
            pl.BlockSpec((1, n_pad, f_pad), lambda b: (b, 0, 0)),         # x
            pl.BlockSpec((1, n_pad, n_pad), lambda b: (b, 0, 0)),         # adj i8
            pl.BlockSpec((n_layers, f_pad, f_pad), lambda b: (0, 0, 0)),  # W bf16
            pl.BlockSpec((n_layers, 1, f_pad), lambda b: (0, 0, 0)),      # a_src
            pl.BlockSpec((n_layers, 1, f_pad), lambda b: (0, 0, 0)),      # a_dst
            pl.BlockSpec((n_layers, 1, f_pad), lambda b: (0, 0, 0)),      # bias
        ],
        out_specs=(
            pl.BlockSpec((1, n_pad, f_pad), lambda b: (b, 0, 0)),
            pl.BlockSpec((1, n_layers, n_pad, n_pad), lambda b: (b, 0, 0, 0)),
        ),
        compiler_params=pltpu.CompilerParams(
            dimension_semantics=("parallel",),
            vmem_limit_bytes=vmem_limit,
        ),
    )(x_p, adj_p, w_stack, a_src_stack, a_dst_stack, b_stack)

    f_last = int(params[-1]["w"].shape[1])
    out = x_out[:, :n, :f_last]
    c_list = [c_out[:, l, :n, :n] for l in range(n_layers)]
    if squeeze_batch:
        out = out[0]
        c_list = [c[0] for c in c_list]
    return out, c_list


# ----------------------------------------------------------------------------
# Parameter init + pure-JAX reference (for correctness checking).
# ----------------------------------------------------------------------------
def init_params(key, layer_dims):
    params = []
    for f_in, f_out in zip(layer_dims[:-1], layer_dims[1:]):
        key, kw, ks, kd, kb = jax.random.split(key, 5)
        scale = 1.0 / jnp.sqrt(jnp.float32(f_in))
        params.append(dict(
            w=jax.random.normal(kw, (f_in, f_out), jnp.float32) * scale,
            a_src=jax.random.normal(ks, (1, f_out), jnp.float32) * scale,
            a_dst=jax.random.normal(kd, (1, f_out), jnp.float32) * scale,
            b=jax.random.normal(kb, (1, f_out), jnp.float32) * 0.1,
        ))
    return params


def reference_forward(x, adj, params, *, skip_connection=True, neg_slope=0.2):
    batched = x.ndim == 3
    if not batched:
        x = x[None]
        adj = adj[None]
    c_list = []
    n_layers = len(params)
    for i, p in enumerate(params):
        h = jnp.einsum("bnf,fo->bno", x, p["w"])
        f_src = jnp.sum(h * p["a_src"][None], axis=-1, keepdims=True)
        f_dst = jnp.sum(h * p["a_dst"][None], axis=-1, keepdims=True)
        e = f_src + jnp.swapaxes(f_dst, -1, -2)
        e = jnp.where(e > 0, e, neg_slope * e)
        e = jnp.where(adj > 0, e, -1e30)
        e_max = jnp.max(e, axis=-1, keepdims=True)
        pm = jnp.exp(e - e_max)
        pm = jnp.where(adj > 0, pm, 0.0)
        denom = jnp.sum(pm, axis=-1, keepdims=True)
        denom = jnp.where(denom > 0, denom, 1.0)
        c = pm / denom
        out = jnp.einsum("bij,bjf->bif", c, h) + p["b"][None]
        if skip_connection and out.shape == x.shape:
            x = x + out
        else:
            x = out
        c_list.append(c)
        if i != n_layers - 1:
            x = jnp.maximum(x, 0.0)
    if not batched:
        x = x[0]
        c_list = [c[0] for c in c_list]
    return x, c_list


# ----------------------------------------------------------------------------
# Demo
# ----------------------------------------------------------------------------
if __name__ == "__main__":
    key = jax.random.PRNGKey(0)
    k_x, k_adj, k_par = jax.random.split(key, 3)

    B = 2           # batch of graphs (parallel grid axis)
    N = 64          # graph nodes
    F_IN = 32       # cfg.input_size = [32]
    HIDDEN = 32     # cfg.layers = [32, 32] -> skip connections apply
    layer_dims = [F_IN, HIDDEN, HIDDEN]

    # Node features.
    x = jax.random.normal(k_x, (B, N, F_IN), jnp.float32)

    # Deterministic binary adjacency with self-loops (every row non-empty).
    adj_logits = jax.random.uniform(k_adj, (B, N, N), jnp.float32)
    adj = (adj_logits > 0.8).astype(jnp.float32)
    adj = jnp.maximum(adj, jnp.eye(N, dtype=jnp.float32)[None])

    params = init_params(k_par, layer_dims)

    out, c_list = graph_attention_forward(x, adj, params, skip_connection=True)
    out = jax.block_until_ready(out)
    c_list = [jax.block_until_ready(c) for c in c_list]

    ref_out, ref_c = reference_forward(x, adj, params, skip_connection=True)

    assert out.shape == (B, N, HIDDEN)
    assert all(c.shape == (B, N, N) for c in c_list)
    assert bool(jnp.all(jnp.isfinite(out)))
    # Attention rows are softmax-normalized (C is emitted in bf16).
    assert bool(jnp.allclose(
        jnp.sum(c_list[0].astype(jnp.float32), axis=-1), 1.0, atol=1e-2))
    # Matches the pure-f32 JAX reference (tolerance covers bf16 MXU operands
    # and bf16 attention writeback).
    assert bool(jnp.allclose(out, ref_out, rtol=3e-2, atol=3e-2))
    for c_k, c_r in zip(c_list, ref_c):
        assert bool(jnp.allclose(c_k.astype(jnp.float32), c_r,
                                 rtol=2e-2, atol=2e-2))

    print("KERNEL_OK")
</pallas_src>

<mosaic_0001>
module attributes {stable_mosaic.version = 11 : i64} {
  func.func @fused_graph_attention_kernel(%arg0: i32, %arg1: memref<1x128x128xf32, #tpu.memory_space<vmem>>, %arg2: memref<1x128x128xi8, #tpu.memory_space<vmem>>, %arg3: memref<2x128x128xbf16, #tpu.memory_space<vmem>>, %arg4: memref<2x1x128xf32, #tpu.memory_space<vmem>>, %arg5: memref<2x1x128xf32, #tpu.memory_space<vmem>>, %arg6: memref<2x1x128xf32, #tpu.memory_space<vmem>>, %arg7: memref<1x128x128xf32, #tpu.memory_space<vmem>>, %arg8: memref<1x2x128x128xbf16, #tpu.memory_space<vmem>>) attributes {dimension_semantics = [#tpu.dimension_semantics<parallel>], iteration_bounds = array<i64: 2>, scalar_prefetch = 0 : i64, scratch_operands = 0 : i64, tpu.core_type = #tpu.core_type<tc>, window_params = [{transform_indices = @transform_0, window_bounds = array<i64: 1, 128, 128>}, {transform_indices = @transform_1, window_bounds = array<i64: 1, 128, 128>}, {pipeline_mode = #tpu.pipeline_mode<synchronous>, transform_indices = @transform_2, window_bounds = array<i64: 2, 128, 128>}, {pipeline_mode = #tpu.pipeline_mode<synchronous>, transform_indices = @transform_3, window_bounds = array<i64: 2, 1, 128>}, {pipeline_mode = #tpu.pipeline_mode<synchronous>, transform_indices = @transform_4, window_bounds = array<i64: 2, 1, 128>}, {pipeline_mode = #tpu.pipeline_mode<synchronous>, transform_indices = @transform_5, window_bounds = array<i64: 2, 1, 128>}, {transform_indices = @transform_6, window_bounds = array<i64: 1, 128, 128>}, {transform_indices = @transform_7, window_bounds = array<i64: 1, 2, 128, 128>}]} {
    %c0 = arith.constant 0 : index
    %c0_0 = arith.constant 0 : index
    %c0_1 = arith.constant 0 : index
    %0 = vector.load %arg1[%c0, %c0_0, %c0_1] : memref<1x128x128xf32, #tpu.memory_space<vmem>>, vector<1x128x128xf32>
    %1 = vector.shape_cast %0 : vector<1x128x128xf32> to vector<128x128xf32>
    %c0_2 = arith.constant 0 : index
    %c0_3 = arith.constant 0 : index
    %c0_4 = arith.constant 0 : index
    %2 = vector.load %arg2[%c0_2, %c0_3, %c0_4] : memref<1x128x128xi8, #tpu.memory_space<vmem>>, vector<1x128x128xi8>
    %3 = vector.shape_cast %2 : vector<1x128x128xi8> to vector<128x128xi8>
    %c0_i8 = arith.constant 0 : i8
    %4 = vector.broadcast %c0_i8 : i8 to vector<128x128xi8>
    %5 = arith.cmpi ne, %3, %4 : vector<128x128xi8>
    %6 = arith.truncf %1 : vector<128x128xf32> to vector<128x128xbf16>
    %c0_5 = arith.constant 0 : index
    %c0_6 = arith.constant 0 : index
    %c0_7 = arith.constant 0 : index
    %7 = vector.load %arg3[%c0_5, %c0_6, %c0_7] : memref<2x128x128xbf16, #tpu.memory_space<vmem>>, vector<1x128x128xbf16>
    %8 = vector.shape_cast %7 : vector<1x128x128xbf16> to vector<128x128xbf16>
    %cst = arith.constant dense<0.000000e+00> : vector<128x128xf32>
    %9 = tpu.matmul %6, %8, %cst {dimension_numbers = #tpu.dot_dimension_numbers<[1], [0], [0], [1], [0, 0, 1, 1], [], []>} : vector<128x128xbf16>, vector<128x128xbf16>, vector<128x128xf32> -> vector<128x128xf32>
    %10 = vector.extract_strided_slice %9 {offsets = [0, 32], sizes = [128, 1], strides = [1, 1]} : vector<128x128xf32> to vector<128x1xf32>
    %11 = vector.extract_strided_slice %9 {offsets = [0, 33], sizes = [128, 1], strides = [1, 1]} : vector<128x128xf32> to vector<128x1xf32>
    %12 = tpu.transpose %11, [1, 0] : vector<128x1xf32> -> vector<1x128xf32>
    %13 = vector.broadcast %10 : vector<128x1xf32> to vector<128x128xf32>
    %14 = vector.broadcast %12 : vector<1x128xf32> to vector<128x128xf32>
    %15 = arith.addf %13, %14 : vector<128x128xf32>
    %cst_8 = arith.constant 0.000000e+00 : f32
    %16 = vector.broadcast %cst_8 : f32 to vector<128x128xf32>
    %17 = arith.cmpf ogt, %15, %16 : vector<128x128xf32>
    %cst_9 = arith.constant 2.000000e-01 : f32
    %18 = vector.broadcast %cst_9 : f32 to vector<128x128xf32>
    %19 = arith.mulf %18, %15 : vector<128x128xf32>
    %20 = arith.select %17, %15, %19 : vector<128x128xi1>, vector<128x128xf32>
    %cst_10 = arith.constant -1.000000e+30 : f32
    %21 = vector.broadcast %cst_10 : f32 to vector<128x128xf32>
    %22 = arith.select %5, %20, %21 : vector<128x128xi1>, vector<128x128xf32>
    %cst_11 = arith.constant dense<0xFF800000> : vector<128xf32>
    %23 = vector.multi_reduction <maximumf>, %22, %cst_11 [1] : vector<128x128xf32> to vector<128xf32>
    %24 = vector.shape_cast %23 : vector<128xf32> to vector<128x1xf32>
    %25 = vector.broadcast %24 : vector<128x1xf32> to vector<128x128xf32>
    %26 = arith.subf %22, %25 : vector<128x128xf32>
    %27 = math.exp %26 : vector<128x128xf32>
    %cst_12 = arith.constant 0.000000e+00 : f32
    %28 = vector.broadcast %cst_12 : f32 to vector<128x128xf32>
    %29 = arith.select %5, %27, %28 : vector<128x128xi1>, vector<128x128xf32>
    %cst_13 = arith.constant dense<0.000000e+00> : vector<128xf32>
    %30 = vector.multi_reduction <add>, %29, %cst_13 [1] : vector<128x128xf32> to vector<128xf32>
    %31 = vector.shape_cast %30 : vector<128xf32> to vector<128x1xf32>
    %cst_14 = arith.constant 0.000000e+00 : f32
    %32 = vector.broadcast %cst_14 : f32 to vector<128x1xf32>
    %33 = arith.cmpf ogt, %31, %32 : vector<128x1xf32>
    %cst_15 = arith.constant 1.000000e+00 : f32
    %34 = vector.broadcast %cst_15 : f32 to vector<128x1xf32>
    %35 = arith.select %33, %31, %34 : vector<128x1xi1>, vector<128x1xf32>
    %36 = tpu.reciprocal %35 : vector<128x1xf32> -> vector<128x1xf32>
    %37 = vector.broadcast %36 : vector<128x1xf32> to vector<128x128xf32>
    %38 = arith.mulf %29, %37 : vector<128x128xf32>
    %39 = arith.truncf %38 : vector<128x128xf32> to vector<128x128xbf16>
    %c0_16 = arith.constant 0 : index
    %c0_17 = arith.constant 0 : index
    %c0_18 = arith.constant 0 : index
    %c0_19 = arith.constant 0 : index
    %40 = vector.load %arg8[%c0_16, %c0_17, %c0_18, %c0_19] : memref<1x2x128x128xbf16, #tpu.memory_space<vmem>>, vector<1x1x128x128xbf16>
    %41 = vector.shape_cast %40 : vector<1x1x128x128xbf16> to vector<128x128xbf16>
    %42 = vector.shape_cast %39 : vector<128x128xbf16> to vector<1x1x128x128xbf16>
    tpu.vector_store %arg8[%c0_16, %c0_17, %c0_18, %c0_19], %42 {strides = array<i32>} : memref<1x2x128x128xbf16, #tpu.memory_space<vmem>>, vector<1x1x128x128xbf16>,
    %43 = arith.truncf %9 : vector<128x128xf32> to vector<128x128xbf16>
    %cst_20 = arith.constant dense<0.000000e+00> : vector<128x128xf32>
    %44 = tpu.matmul %39, %43, %cst_20 {dimension_numbers = #tpu.dot_dimension_numbers<[1], [0], [0], [1], [0, 0, 1, 1], [], []>} : vector<128x128xbf16>, vector<128x128xbf16>, vector<128x128xf32> -> vector<128x128xf32>
    %c0_21 = arith.constant 0 : index
    %c0_22 = arith.constant 0 : index
    %c0_23 = arith.constant 0 : index
    %45 = vector.load %arg6[%c0_21, %c0_22, %c0_23] : memref<2x1x128xf32, #tpu.memory_space<vmem>>, vector<1x1x128xf32>
    %46 = vector.shape_cast %45 : vector<1x1x128xf32> to vector<1x128xf32>
    %47 = vector.broadcast %46 : vector<1x128xf32> to vector<128x128xf32>
    %48 = arith.addf %44, %47 : vector<128x128xf32>
    %49 = arith.addf %1, %48 : vector<128x128xf32>
    %cst_24 = arith.constant 0.000000e+00 : f32
    %50 = vector.broadcast %cst_24 : f32 to vector<128x128xf32>
    %51 = arith.maximumf %49, %50 : vector<128x128xf32>
    %52 = arith.truncf %51 : vector<128x128xf32> to vector<128x128xbf16>
    %c1 = arith.constant 1 : index
    %c0_25 = arith.constant 0 : index
    %c0_26 = arith.constant 0 : index
    %53 = vector.load %arg3[%c1, %c0_25, %c0_26] : memref<2x128x128xbf16, #tpu.memory_space<vmem>>, vector<1x128x128xbf16>
    %54 = vector.shape_cast %53 : vector<1x128x128xbf16> to vector<128x128xbf16>
    %cst_27 = arith.constant dense<0.000000e+00> : vector<128x128xf32>
    %55 = tpu.matmul %52, %54, %cst_27 {dimension_numbers = #tpu.dot_dimension_numbers<[1], [0], [0], [1], [0, 0, 1, 1], [], []>} : vector<128x128xbf16>, vector<128x128xbf16>, vector<128x128xf32> -> vector<128x128xf32>
    %56 = vector.extract_strided_slice %55 {offsets = [0, 32], sizes = [128, 1], strides = [1, 1]} : vector<128x128xf32> to vector<128x1xf32>
    %57 = vector.extract_strided_slice %55 {offsets = [0, 33], sizes = [128, 1], strides = [1, 1]} : vector<128x128xf32> to vector<128x1xf32>
    %58 = tpu.transpose %57, [1, 0] : vector<128x1xf32> -> vector<1x128xf32>
    %59 = vector.broadcast %56 : vector<128x1xf32> to vector<128x128xf32>
    %60 = vector.broadcast %58 : vector<1x128xf32> to vector<128x128xf32>
    %61 = arith.addf %59, %60 : vector<128x128xf32>
    %cst_28 = arith.constant 0.000000e+00 : f32
    %62 = vector.broadcast %cst_28 : f32 to vector<128x128xf32>
    %63 = arith.cmpf ogt, %61, %62 : vector<128x128xf32>
    %cst_29 = arith.constant 2.000000e-01 : f32
    %64 = vector.broadcast %cst_29 : f32 to vector<128x128xf32>
    %65 = arith.mulf %64, %61 : vector<128x128xf32>
    %66 = arith.select %63, %61, %65 : vector<128x128xi1>, vector<128x128xf32>
    %cst_30 = arith.constant -1.000000e+30 : f32
    %67 = vector.broadcast %cst_30 : f32 to vector<128x128xf32>
    %68 = arith.select %5, %66, %67 : vector<128x128xi1>, vector<128x128xf32>
    %cst_31 = arith.constant dense<0xFF800000> : vector<128xf32>
    %69 = vector.multi_reduction <maximumf>, %68, %cst_31 [1] : vector<128x128xf32> to vector<128xf32>
    %70 = vector.shape_cast %69 : vector<128xf32> to vector<128x1xf32>
    %71 = vector.broadcast %70 : vector<128x1xf32> to vector<128x128xf32>
    %72 = arith.subf %68, %71 : vector<128x128xf32>
    %73 = math.exp %72 : vector<128x128xf32>
    %cst_32 = arith.constant 0.000000e+00 : f32
    %74 = vector.broadcast %cst_32 : f32 to vector<128x128xf32>
    %75 = arith.select %5, %73, %74 : vector<128x128xi1>, vector<128x128xf32>
    %cst_33 = arith.constant dense<0.000000e+00> : vector<128xf32>
    %76 = vector.multi_reduction <add>, %75, %cst_33 [1] : vector<128x128xf32> to vector<128xf32>
    %77 = vector.shape_cast %76 : vector<128xf32> to vector<128x1xf32>
    %cst_34 = arith.constant 0.000000e+00 : f32
    %78 = vector.broadcast %cst_34 : f32 to vector<128x1xf32>
    %79 = arith.cmpf ogt, %77, %78 : vector<128x1xf32>
    %cst_35 = arith.constant 1.000000e+00 : f32
    %80 = vector.broadcast %cst_35 : f32 to vector<128x1xf32>
    %81 = arith.select %79, %77, %80 : vector<128x1xi1>, vector<128x1xf32>
    %82 = tpu.reciprocal %81 : vector<128x1xf32> -> vector<128x1xf32>
    %83 = vector.broadcast %82 : vector<128x1xf32> to vector<128x128xf32>
    %84 = arith.mulf %75, %83 : vector<128x128xf32>
    %85 = arith.truncf %84 : vector<128x128xf32> to vector<128x128xbf16>
    %c0_36 = arith.constant 0 : index
    %c1_37 = arith.constant 1 : index
    %c0_38 = arith.constant 0 : index
    %c0_39 = arith.constant 0 : index
    %86 = vector.load %arg8[%c0_36, %c1_37, %c0_38, %c0_39] : memref<1x2x128x128xbf16, #tpu.memory_space<vmem>>, vector<1x1x128x128xbf16>
    %87 = vector.shape_cast %86 : vector<1x1x128x128xbf16> to vector<128x128xbf16>
    %88 = vector.shape_cast %85 : vector<128x128xbf16> to vector<1x1x128x128xbf16>
    tpu.vector_store %arg8[%c0_36, %c1_37, %c0_38, %c0_39], %88 {strides = array<i32>} : memref<1x2x128x128xbf16, #tpu.memory_space<vmem>>, vector<1x1x128x128xbf16>,
    %89 = arith.truncf %55 : vector<128x128xf32> to vector<128x128xbf16>
    %cst_40 = arith.constant dense<0.000000e+00> : vector<128x128xf32>
    %90 = tpu.matmul %85, %89, %cst_40 {dimension_numbers = #tpu.dot_dimension_numbers<[1], [0], [0], [1], [0, 0, 1, 1], [], []>} : vector<128x128xbf16>, vector<128x128xbf16>, vector<128x128xf32> -> vector<128x128xf32>
    %c1_41 = arith.constant 1 : index
    %c0_42 = arith.constant 0 : index
    %c0_43 = arith.constant 0 : index
    %91 = vector.load %arg6[%c1_41, %c0_42, %c0_43] : memref<2x1x128xf32, #tpu.memory_space<vmem>>, vector<1x1x128xf32>
    %92 = vector.shape_cast %91 : vector<1x1x128xf32> to vector<1x128xf32>
    %93 = vector.broadcast %92 : vector<1x128xf32> to vector<128x128xf32>
    %94 = arith.addf %90, %93 : vector<128x128xf32>
    %95 = arith.addf %51, %94 : vector<128x128xf32>
    %c0_44 = arith.constant 0 : index
    %c0_45 = arith.constant 0 : index
    %c0_46 = arith.constant 0 : index
    %96 = vector.load %arg7[%c0_44, %c0_45, %c0_46] : memref<1x128x128xf32, #tpu.memory_space<vmem>>, vector<1x128x128xf32>
    %97 = vector.shape_cast %96 : vector<1x128x128xf32> to vector<128x128xf32>
    %98 = vector.shape_cast %95 : vector<128x128xf32> to vector<1x128x128xf32>
    tpu.vector_store %arg7[%c0_44, %c0_45, %c0_46], %98 {strides = array<i32>} : memref<1x128x128xf32, #tpu.memory_space<vmem>>, vector<1x128x128xf32>,
    return
  }
  func.func @transform_0(%arg0: i32) -> (i32, i32, i32) {
    %c0_i32 = arith.constant 0 : i32
    %c0_i32_0 = arith.constant 0 : i32
    %c0_i32_1 = arith.constant 0 : i32
    return %arg0, %c0_i32, %c0_i32_0 : i32, i32, i32
  }
  func.func @transform_1(%arg0: i32) -> (i32, i32, i32) {
    %c0_i32 = arith.constant 0 : i32
    %c0_i32_0 = arith.constant 0 : i32
    %c0_i32_1 = arith.constant 0 : i32
    return %arg0, %c0_i32, %c0_i32_0 : i32, i32, i32
  }
  func.func @transform_2(%arg0: i32) -> (i32, i32, i32) {
    %c0_i32 = arith.constant 0 : i32
    %c0_i32_0 = arith.constant 0 : i32
    %c0_i32_1 = arith.constant 0 : i32
    %c0_i32_2 = arith.constant 0 : i32
    return %c0_i32, %c0_i32_0, %c0_i32_1 : i32, i32, i32
  }
  func.func @transform_3(%arg0: i32) -> (i32, i32, i32) {
    %c0_i32 = arith.constant 0 : i32
    %c0_i32_0 = arith.constant 0 : i32
    %c0_i32_1 = arith.constant 0 : i32
    %c0_i32_2 = arith.constant 0 : i32
    return %c0_i32, %c0_i32_0, %c0_i32_1 : i32, i32, i32
  }
  func.func @transform_4(%arg0: i32) -> (i32, i32, i32) {
    %c0_i32 = arith.constant 0 : i32
    %c0_i32_0 = arith.constant 0 : i32
    %c0_i32_1 = arith.constant 0 : i32
    %c0_i32_2 = arith.constant 0 : i32
    return %c0_i32, %c0_i32_0, %c0_i32_1 : i32, i32, i32
  }
  func.func @transform_5(%arg0: i32) -> (i32, i32, i32) {
    %c0_i32 = arith.constant 0 : i32
    %c0_i32_0 = arith.constant 0 : i32
    %c0_i32_1 = arith.constant 0 : i32
    %c0_i32_2 = arith.constant 0 : i32
    return %c0_i32, %c0_i32_0, %c0_i32_1 : i32, i32, i32
  }
  func.func @transform_6(%arg0: i32) -> (i32, i32, i32) {
    %c0_i32 = arith.constant 0 : i32
    %c0_i32_0 = arith.constant 0 : i32
    %c0_i32_1 = arith.constant 0 : i32
    return %arg0, %c0_i32, %c0_i32_0 : i32, i32, i32
  }
  func.func @transform_7(%arg0: i32) -> (i32, i32, i32, i32) {
    %c0_i32 = arith.constant 0 : i32
    %c0_i32_0 = arith.constant 0 : i32
    %c0_i32_1 = arith.constant 0 : i32
    %c0_i32_2 = arith.constant 0 : i32
    return %arg0, %c0_i32, %c0_i32_0, %c0_i32_1 : i32, i32, i32, i32
  }
}

</mosaic_0001>

<llo_original>
// kernel: tpu_custom_call.1
$region0: #{tpu_custom_call.1}
  #allocation0 [shape = 'u32[]', space=smem, size = 0x4, offset = 0x4, fixed_abs, tag = 'smem constant byte address 0x4 - core index']
  #allocation1 [shape = 'u32[144,128]{1,0:T(1,128)}', space=vmem, size = 0x12000, scoped, tag = 'internal scratch']
  %s0 = inlined_call_operand.hbm [shape: f32[2,128,128], index: 0, kind: input, shape index: {}]
  %s1 = inlined_call_operand.hbm [shape: s8[2,128,128], index: 1, kind: input, shape index: {}]
  %s2 = inlined_call_operand.hbm [shape: bf16[2,128,128], index: 2, kind: input, shape index: {}]
  %s3 = inlined_call_operand.vmem [shape: f32[2,1,128], index: 3, kind: input, shape index: {}]
  %s4 = inlined_call_operand.vmem [shape: f32[2,1,128], index: 4, kind: input, shape index: {}]
  %s5 = inlined_call_operand.vmem [shape: f32[2,1,128], index: 5, kind: input, shape index: {}]
  %s6 = inlined_call_operand.hbm [shape: f32[2,128,128], index: 6, kind: output, shape index: {0}]
  %s7 = inlined_call_operand.hbm [shape: bf16[2,2,128,128], index: 7, kind: output, shape index: {1}]
  %8 = xla_tuple %s6, %s7
  %s9 = sld [smem:[#allocation0]]
  $region77: #{tpu_custom_call.1} parent=0
    _
  %s11 = ssub.s32 1, %s9
  %s12 = scalar_select 0, %s11, %s9
  $region1: #{tpu_custom_call.1} parent=0
    #allocation2 [shape = 'u8[131072]{0}', space=vmem, size = 0x20000, scoped, tag = 'input window, operand 0']
    #allocation3 [shape = 's32[2]{0}', space=sflag, size = 0x8, scoped, tag = 'scoped memory for tpu_custom_call.1']
    #allocation4 [shape = 's32[2]{0}', space=sflag, size = 0x8, scoped, tag = 'scoped memory for tpu_custom_call.1']
    #allocation5 [shape = 'u8[32768]{0}', space=vmem, size = 0x8000, scoped, tag = 'input window, operand 1']
    #allocation6 [shape = 's32[2]{0}', space=sflag, size = 0x8, scoped, tag = 'scoped memory for tpu_custom_call.1']
    #allocation7 [shape = 'u8[65536]{0}', space=vmem, size = 0x10000, scoped, tag = 'input window, operand 2, single buffered']
    #allocation8 [shape = 'u8[131072]{0}', space=vmem, size = 0x20000, scoped, tag = 'output window, operand 0']
    #allocation9 [shape = 'u8[131072]{0}', space=vmem, size = 0x20000, scoped, tag = 'output window, operand 1']
    #allocation10 [shape = 's32[2]{0}', space=sflag, size = 0x8, scoped, tag = 'scoped memory for tpu_custom_call.1']
    %13 = vsyncpa [#allocation3], 0
    %s14 = scalar_lea.sflag [#allocation3], 1
    %15 = vsyncpa %s14, 0
    %16 = vsyncpa [#allocation6], 0
    %s17 = scalar_lea.sflag [#allocation6], 1
    %18 = vsyncpa %s17, 0
    %19 = vsyncpa [#allocation4], 0
    %s20 = scalar_lea.sflag [#allocation4], 1
    %21 = vsyncpa %s20, 0
    %22 = vsyncpa [#allocation10], 0
    %s23 = scalar_lea.sflag [#allocation10], 1
    %24 = vsyncpa %s23, 0
    loop: start=0, step=1, limit=4
    $region2: #{tpu_custom_call.1} parent=1 // loop_pre_header
      _
    $region3: #{tpu_custom_call.1} parent=1 // loop_header
      %s26 = sphi 0, %s30
      %p27 = scmp.ge.s32.totalorder %s26, 4
      %s36 = sphi 0, %s38
      %s39 = sphi 0, %s36
      %s40 = sphi 0, %s39
      %s56 = sphi 0, %s40
      %s62 = sphi 0, %s64
      %s65 = sphi 0, %s62
      %s66 = sphi 0, %s65
      %s82 = sphi 0, %s66
      %s86 = sphi 0, %s86
      %s88 = sphi 0, %s86
      %s89 = sphi 0, %s88
      %s103 = sphi 0, %s89
      %s107 = sphi 0, %s107
      %s109 = sphi 0, %s107
      %s110 = sphi 0, %s109
      %s124 = sphi 0, %s110
      %s128 = sphi 0, %s128
      %s130 = sphi 0, %s128
      %s131 = sphi 0, %s130
      %s145 = sphi 0, %s131
      %s149 = sphi 0, %s149
      %s151 = sphi 0, %s149
      %s152 = sphi 0, %s151
      %s166 = sphi 0, %s152
      %s172 = sphi 0, %s174
      %s175 = sphi 0, %s172
      %s176 = sphi 0, %s175
      %s192 = sphi 0, %s176
      %s198 = sphi 0, %s200
      %s201 = sphi 0, %s198
      %s202 = sphi 0, %s201
      %s218 = sphi 0, %s202
    $region4: #{tpu_custom_call.1} parent=1 // loop_header_branch
      %29 = sbr.rel (%p27) target = $region8
    $region5: #{tpu_custom_call.1} parent=1 // loop_body
      %s31 = ssub.s32 %s26, 1
      %s32 = ssub.s32 %s26, 2
      %s33 = sadd.s32 %s26, 1
      %s34 = ssub.s32 %s26, %s33
      %p35 = scmp.eq.s32.totalorder %s34, 0
      %s37 = sadd.s32 %s36, 1
      %s38 = scalar_select %p35, %s36, %s37
      %p41 = pneg %p35
      %p42 = scmp.eq.s32.totalorder %s26, 1
      %p43 = por %p41, %p42
      %p44 = scmp.ne.s32.totalorder %s36, %s39
      %p45 = scmp.eq.s32.totalorder %s26, 0
      %p46 = por %p44, %p45
      %p47 = scmp.ne.s32.totalorder %s36, %s39
      %p48 = scmp.eq.s32.totalorder %s31, 1
      %p49 = por %p47, %p48
      %p50 = scmp.ne.s32.totalorder %s39, %s40
      %p51 = scmp.eq.s32.totalorder %s31, 0
      %p52 = por %p50, %p51
      %p53 = scmp.ne.s32.totalorder %s39, %s40
      %p54 = scmp.eq.s32.totalorder %s32, 1
      %p55 = por %p53, %p54
      %p57 = scmp.ne.s32.totalorder %s40, %s56
      %p58 = scmp.eq.s32.totalorder %s32, 0
      %p59 = por %p57, %p58
      %s60 = ssub.s32 %s26, %s33
      %p61 = scmp.eq.s32.totalorder %s60, 0
      %s63 = sadd.s32 %s62, 1
      %s64 = scalar_select %p61, %s62, %s63
      %p67 = pneg %p61
      %p68 = scmp.eq.s32.totalorder %s26, 1
      %p69 = por %p67, %p68
      %p70 = scmp.ne.s32.totalorder %s62, %s65
      %p71 = scmp.eq.s32.totalorder %s26, 0
      %p72 = por %p70, %p71
      %p73 = scmp.ne.s32.totalorder %s62, %s65
      %p74 = scmp.eq.s32.totalorder %s31, 1
      %p75 = por %p73, %p74
      %p76 = scmp.ne.s32.totalorder %s65, %s66
      %p77 = scmp.eq.s32.totalorder %s31, 0
      %p78 = por %p76, %p77
      %p79 = scmp.ne.s32.totalorder %s65, %s66
      %p80 = scmp.eq.s32.totalorder %s32, 1
      %p81 = por %p79, %p80
      %p83 = scmp.ne.s32.totalorder %s66, %s82
      %p84 = scmp.eq.s32.totalorder %s32, 0
      %p85 = por %p83, %p84
      %s87 = sadd.s32 %s86, 1
      %p90 = scmp.eq.s32.totalorder %s26, 1
      %p91 = scmp.ne.s32.totalorder %s86, %s88
      %p92 = scmp.eq.s32.totalorder %s26, 0
      %p93 = por %p91, %p92
      %p94 = scmp.ne.s32.totalorder %s86, %s88
      %p95 = scmp.eq.s32.totalorder %s31, 1
      %p96 = por %p94, %p95
      %p97 = scmp.ne.s32.totalorder %s88, %s89
      %p98 = scmp.eq.s32.totalorder %s31, 0
      %p99 = por %p97, %p98
      %p100 = scmp.ne.s32.totalorder %s88, %s89
      %p101 = scmp.eq.s32.totalorder %s32, 1
      %p102 = por %p100, %p101
      %p104 = scmp.ne.s32.totalorder %s89, %s103
      %p105 = scmp.eq.s32.totalorder %s32, 0
      %p106 = por %p104, %p105
      %s108 = sadd.s32 %s107, 1
      %p111 = scmp.eq.s32.totalorder %s26, 1
      %p112 = scmp.ne.s32.totalorder %s107, %s109
      %p113 = scmp.eq.s32.totalorder %s26, 0
      %p114 = por %p112, %p113
      %p115 = scmp.ne.s32.totalorder %s107, %s109
      %p116 = scmp.eq.s32.totalorder %s31, 1
      %p117 = por %p115, %p116
      %p118 = scmp.ne.s32.totalorder %s109, %s110
      %p119 = scmp.eq.s32.totalorder %s31, 0
      %p120 = por %p118, %p119
      %p121 = scmp.ne.s32.totalorder %s109, %s110
      %p122 = scmp.eq.s32.totalorder %s32, 1
      %p123 = por %p121, %p122
      %p125 = scmp.ne.s32.totalorder %s110, %s124
      %p126 = scmp.eq.s32.totalorder %s32, 0
      %p127 = por %p125, %p126
      %s129 = sadd.s32 %s128, 1
      %p132 = scmp.eq.s32.totalorder %s26, 1
      %p133 = scmp.ne.s32.totalorder %s128, %s130
      %p134 = scmp.eq.s32.totalorder %s26, 0
      %p135 = por %p133, %p134
      %p136 = scmp.ne.s32.totalorder %s128, %s130
      %p137 = scmp.eq.s32.totalorder %s31, 1
      %p138 = por %p136, %p137
      %p139 = scmp.ne.s32.totalorder %s130, %s131
      %p140 = scmp.eq.s32.totalorder %s31, 0
      %p141 = por %p139, %p140
      %p142 = scmp.ne.s32.totalorder %s130, %s131
      %p143 = scmp.eq.s32.totalorder %s32, 1
      %p144 = por %p142, %p143
      %p146 = scmp.ne.s32.totalorder %s131, %s145
      %p147 = scmp.eq.s32.totalorder %s32, 0
      %p148 = por %p146, %p147
      %s150 = sadd.s32 %s149, 1
      %p153 = scmp.eq.s32.totalorder %s26, 1
      %p154 = scmp.ne.s32.totalorder %s149, %s151
      %p155 = scmp.eq.s32.totalorder %s26, 0
      %p156 = por %p154, %p155
      %p157 = scmp.ne.s32.totalorder %s149, %s151
      %p158 = scmp.eq.s32.totalorder %s31, 1
      %p159 = por %p157, %p158
      %p160 = scmp.ne.s32.totalorder %s151, %s152
      %p161 = scmp.eq.s32.totalorder %s31, 0
      %p162 = por %p160, %p161
      %p163 = scmp.ne.s32.totalorder %s151, %s152
      %p164 = scmp.eq.s32.totalorder %s32, 1
      %p165 = por %p163, %p164
      %p167 = scmp.ne.s32.totalorder %s152, %s166
      %p168 = scmp.eq.s32.totalorder %s32, 0
      %p169 = por %p167, %p168
      %s170 = ssub.s32 %s26, %s33
      %p171 = scmp.eq.s32.totalorder %s170, 0
      %s173 = sadd.s32 %s172, 1
      %s174 = scalar_select %p171, %s172, %s173
      %p177 = pneg %p171
      %p178 = scmp.eq.s32.totalorder %s26, 1
      %p179 = por %p177, %p178
      %p180 = scmp.ne.s32.totalorder %s172, %s175
      %p181 = scmp.eq.s32.totalorder %s26, 0
      %p182 = por %p180, %p181
      %p183 = scmp.ne.s32.totalorder %s172, %s175
      %p184 = scmp.eq.s32.totalorder %s31, 1
      %p185 = por %p183, %p184
      %p186 = scmp.ne.s32.totalorder %s175, %s176
      %p187 = scmp.eq.s32.totalorder %s31, 0
      %p188 = por %p186, %p187
      %p189 = scmp.ne.s32.totalorder %s175, %s176
      %p190 = scmp.eq.s32.totalorder %s32, 1
      %p191 = por %p189, %p190
      %p193 = scmp.ne.s32.totalorder %s176, %s192
      %p194 = scmp.eq.s32.totalorder %s32, 0
      %p195 = por %p193, %p194
      %s196 = ssub.s32 %s26, %s33
      %p197 = scmp.eq.s32.totalorder %s196, 0
      %s199 = sadd.s32 %s198, 1
      %s200 = scalar_select %p197, %s198, %s199
      %p203 = pneg %p197
      %p204 = scmp.eq.s32.totalorder %s26, 1
      %p205 = por %p203, %p204
      %p206 = scmp.ne.s32.totalorder %s198, %s201
      %p207 = scmp.eq.s32.totalorder %s26, 0
      %p208 = por %p206, %p207
      %p209 = scmp.ne.s32.totalorder %s198, %s201
      %p210 = scmp.eq.s32.totalorder %s31, 1
      %p211 = por %p209, %p210
      %p212 = scmp.ne.s32.totalorder %s201, %s202
      %p213 = scmp.eq.s32.totalorder %s31, 0
      %p214 = por %p212, %p213
      %p215 = scmp.ne.s32.totalorder %s201, %s202
      %p216 = scmp.eq.s32.totalorder %s32, 1
      %p217 = por %p215, %p216
      %p219 = scmp.ne.s32.totalorder %s202, %s218
      %p220 = scmp.eq.s32.totalorder %s32, 0
      %p221 = por %p219, %p220
      %p222 = scmp.le.s32.totalorder 1, %s26
      %p223 = scmp.lt.s32.totalorder %s26, 3
      %p224 = pnand %p222, %p223
      %p225 = pneg %p224
      // Predicated region
      $region9: #{tpu_custom_call.1} parent=5 // pred_check
        _
      $region10: #{tpu_custom_call.1} parent=5 // pred_check_branch
        %227 = sbr.rel (%p224) target = $region12
      $region11: #{tpu_custom_call.1} parent=5 // pred_region
        %s228 = ssub.s32 %s26, 1
        // Predicated region
        $region13: #{tpu_custom_call.1} parent=11 // pred_check
          %p229 = pneg %p99
        $region14: #{tpu_custom_call.1} parent=11 // pred_check_branch
          %231 = sbr.rel (%p229) target = $region16
        $region15: #{tpu_custom_call.1} parent=11 // pred_region
          %s233 = ssub.s32 2048, 2048
          %234 = vsyncadd [#allocation6], %s233
          %s235 = sshll.u32 [#allocation7], 4
          %s236 = int_to_ptr.vmem [resolvable:$true] %s235
          %241 = dma.hbm_to_vmem [thread:$0]  %s2, 2048, %s236, [#allocation6], 64, 64, 4
        $region16: #{tpu_custom_call.1} parent=11 // pred_fallthru
          _
        // Predicated region
        $region17: #{tpu_custom_call.1} parent=11 // pred_check
          %p242 = pneg %p120
        $region18: #{tpu_custom_call.1} parent=11 // pred_check_branch
          %244 = sbr.rel (%p242) target = $region20
        $region19: #{tpu_custom_call.1} parent=11 // pred_region
          _
        $region20: #{tpu_custom_call.1} parent=11 // pred_fallthru
          _
        // Predicated region
        $region21: #{tpu_custom_call.1} parent=11 // pred_check
          %p245 = pneg %p141
        $region22: #{tpu_custom_call.1} parent=11 // pred_check_branch
          %247 = sbr.rel (%p245) target = $region24
        $region23: #{tpu_custom_call.1} parent=11 // pred_region
          _
        $region24: #{tpu_custom_call.1} parent=11 // pred_fallthru
          _
        // Predicated region
        $region25: #{tpu_custom_call.1} parent=11 // pred_check
          %p248 = pneg %p162
        $region26: #{tpu_custom_call.1} parent=11 // pred_check_branch
          %250 = sbr.rel (%p248) target = $region28
        $region27: #{tpu_custom_call.1} parent=11 // pred_region
          _
        $region28: #{tpu_custom_call.1} parent=11 // pred_fallthru
          _
      $region12: #{tpu_custom_call.1} parent=5 // pred_fallthru
        _
      %p251 = scmp.lt.s32.totalorder %s26, 2
      // Predicated region
      $region29: #{tpu_custom_call.1} parent=5 // pred_check
        %p252 = pneg %p251
      $region30: #{tpu_custom_call.1} parent=5 // pred_check_branch
        %254 = sbr.rel (%p252) target = $region32
      $region31: #{tpu_custom_call.1} parent=5 // pred_region
        // Predicated region
        $region33: #{tpu_custom_call.1} parent=31 // pred_check
          %p255 = pneg %p46
        $region34: #{tpu_custom_call.1} parent=31 // pred_check_branch
          %257 = sbr.rel (%p255) target = $region36
        $region35: #{tpu_custom_call.1} parent=31 // pred_region
          %s258 = sand.u32 %s36, 1
          %s259 = scalar_lea.sflag [#allocation3], %s258
          %s260 = sand.u32 %s36, 1
          %s261 = smul.addr %s260, 128
          %s262 = scalar_lea.vmem [#allocation2], %s261
          %s264 = ssub.s32 2048, 2048
          %265 = vsyncadd %s259, %s264
          %s266 = smul.addr %s26, 16
          %s267 = smul.addr %s266, 128
          %s268 = scalar_lea.hbm %s0, %s267
          %s269 = sshll.u32 %s262, 4
          %s270 = int_to_ptr.vmem [resolvable:$true] %s269
          %275 = dma.hbm_to_vmem [thread:$0]  %s268, 2048, %s270, %s259, 128, 128, 8
        $region36: #{tpu_custom_call.1} parent=31 // pred_fallthru
          _
        // Predicated region
        $region37: #{tpu_custom_call.1} parent=31 // pred_check
          %p276 = pneg %p72
        $region38: #{tpu_custom_call.1} parent=31 // pred_check_branch
          %278 = sbr.rel (%p276) target = $region40
        $region39: #{tpu_custom_call.1} parent=31 // pred_region
          %s279 = sand.u32 %s26, 1
          %s280 = scalar_lea.sflag [#allocation6], %s279
          %s281 = sand.u32 %s62, 1
          %s282 = smul.addr %s281, 32
          %s283 = scalar_lea.vmem [#allocation5], %s282
          %s285 = ssub.s32 512, 512
          %286 = vsyncadd %s280, %s285
          %s287 = smul.addr %s26, 4
          %s288 = smul.addr %s287, 128
          %s289 = scalar_lea.hbm %s1, %s288
          %s290 = sshll.u32 %s283, 4
          %s291 = int_to_ptr.vmem [resolvable:$true] %s290
          %296 = dma.hbm_to_vmem [thread:$0]  %s289, 512, %s291, %s280, 128, 128, 8
        $region40: #{tpu_custom_call.1} parent=31 // pred_fallthru
          _
      $region32: #{tpu_custom_call.1} parent=5 // pred_fallthru
        _
      %p297 = scmp.le.s32.totalorder 1, %s26
      %p298 = scmp.lt.s32.totalorder %s26, 3
      %p299 = pnand %p297, %p298
      %p300 = pneg %p299
      // Predicated region
      $region41: #{tpu_custom_call.1} parent=5 // pred_check
        _
      $region42: #{tpu_custom_call.1} parent=5 // pred_check_branch
        %302 = sbr.rel (%p299) target = $region44
      $region43: #{tpu_custom_call.1} parent=5 // pred_region
        %s303 = ssub.s32 %s26, 1
        %s304 = sand.u32 %s39, 1
        %s305 = scalar_lea.sflag [#allocation3], %s304
        %s306 = sand.u32 %s39, 1
        %s307 = smul.addr %s306, 128
        %s308 = scalar_lea.vmem [#allocation2], %s307
        // Predicated region
        $region45: #{tpu_custom_call.1} parent=43 // pred_check
          %p309 = pneg %p52
        $region46: #{tpu_custom_call.1} parent=43 // pred_check_branch
          %311 = sbr.rel (%p309) target = $region48
        $region47: #{tpu_custom_call.1} parent=43 // pred_region
          %312 = dma.done %s305, 2048
        $region48: #{tpu_custom_call.1} parent=43 // pred_fallthru
          _
        %s313 = sand.u32 %s31, 1
        %s314 = scalar_lea.sflag [#allocation6], %s313
        %s315 = sand.u32 %s65, 1
        %s316 = smul.addr %s315, 32
        %s317 = scalar_lea.vmem [#allocation5], %s316
        // Predicated region
        $region49: #{tpu_custom_call.1} parent=43 // pred_check
          %p318 = pneg %p78
        $region50: #{tpu_custom_call.1} parent=43 // pred_check_branch
          %320 = sbr.rel (%p318) target = $region52
        $region51: #{tpu_custom_call.1} parent=43 // pred_region
          %321 = dma.done %s314, 512
        $region52: #{tpu_custom_call.1} parent=43 // pred_fallthru
          _
        // Predicated region
        $region53: #{tpu_custom_call.1} parent=43 // pred_check
          %p322 = pneg %p99
        $region54: #{tpu_custom_call.1} parent=43 // pred_check_branch
          %324 = sbr.rel (%p322) target = $region56
        $region55: #{tpu_custom_call.1} parent=43 // pred_region
          %325 = dma.done [#allocation6], 2048
        $region56: #{tpu_custom_call.1} parent=43 // pred_fallthru
          _
        %s326 = sand.u32 %s39, 1
        %s327 = scalar_lea.sflag [#allocation3], %s326
        %s328 = sand.u32 %s39, 1
        %s329 = smul.addr %s328, 128
        %s330 = scalar_lea.vmem [#allocation2], %s329
        %p331 = pneg %p52
        %p332 = pneg %p49
        %s333 = sand.u32 %s31, 1
        %s334 = scalar_lea.sflag [#allocation6], %s333
        %s335 = sand.u32 %s65, 1
        %s336 = smul.addr %s335, 32
        %s337 = scalar_lea.vmem [#allocation5], %s336
        %p338 = pneg %p78
        %p339 = pneg %p75
        %p340 = pneg %p99
        %p341 = pneg %p96
        %p342 = pneg %p120
        %p343 = pneg %p117
        %p344 = pneg %p141
        %p345 = pneg %p138
        %p346 = pneg %p162
        %p347 = pneg %p159
        %p348 = pneg %p188
        %p349 = pneg %p185
        %s350 = sand.u32 %s175, 1
        %s351 = scalar_lea.sflag [#allocation4], %s350
        %s352 = sand.u32 %s175, 1
        %s353 = smul.addr %s352, 128
        %s354 = scalar_lea.vmem [#allocation8], %s353
        %p355 = pneg %p214
        %p356 = pneg %p211
        %s357 = sand.u32 %s201, 1
        %s358 = scalar_lea.sflag [#allocation10], %s357
        %s359 = sand.u32 %s201, 1
        %s360 = smul.addr %s359, 128
        %s361 = scalar_lea.vmem [#allocation9], %s360
        %v365 = vld [vmem:[%s308] sm:$0xff]
        %v366 = vld [vmem:[%s308 + $0x8] sm:$0xff]
        %v367 = vld [vmem:[%s308 + $0x10] sm:$0xff]
        %v368 = vld [vmem:[%s308 + $0x18] sm:$0xff]
        %v369 = vld [vmem:[%s308 + $0x20] sm:$0xff]
        %v370 = vld [vmem:[%s308 + $0x28] sm:$0xff]
        %v371 = vld [vmem:[%s308 + $0x30] sm:$0xff]
        %v372 = vld [vmem:[%s308 + $0x38] sm:$0xff]
        %v373 = vld [vmem:[%s308 + $0x40] sm:$0xff]
        %v374 = vld [vmem:[%s308 + $0x48] sm:$0xff]
        %v375 = vld [vmem:[%s308 + $0x50] sm:$0xff]
        %v376 = vld [vmem:[%s308 + $0x58] sm:$0xff]
        %v377 = vld [vmem:[%s308 + $0x60] sm:$0xff]
        %v378 = vld [vmem:[%s308 + $0x68] sm:$0xff]
        %v379 = vld [vmem:[%s308 + $0x70] sm:$0xff]
        %v380 = vld [vmem:[%s308 + $0x78] sm:$0xff]
        %v381 = vld [vmem:[%s317] sm:$0xff]
        %v382 = vld [vmem:[%s317 + $0x8] sm:$0xff]
        %v383 = vld [vmem:[%s317 + $0x10] sm:$0xff]
        %v384 = vld [vmem:[%s317 + $0x18] sm:$0xff]
        %vm385 = vnez %v381
        %vm386 = vnez %v382
        %vm387 = vnez %v383
        %vm388 = vnez %v384
        %v389 = vpack.c.bf16 %v366, %v365
        %v390 = vpack.c.bf16 %v368, %v367
        %v391 = vpack.c.bf16 %v370, %v369
        %v392 = vpack.c.bf16 %v372, %v371
        %v393 = vpack.c.bf16 %v374, %v373
        %v394 = vpack.c.bf16 %v376, %v375
        %v395 = vpack.c.bf16 %v378, %v377
        %v396 = vpack.c.bf16 %v380, %v379
        %v397 = vld [vmem:[#allocation7] sm:$0xf]
        %v398 = vld [vmem:[#allocation7 + $0x4] sm:$0xf]
        %v399 = vld [vmem:[#allocation7 + $0x8] sm:$0xf]
        %v400 = vld [vmem:[#allocation7 + $0xc] sm:$0xf]
        %v401 = vld [vmem:[#allocation7 + $0x10] sm:$0xf]
        %v402 = vld [vmem:[#allocation7 + $0x14] sm:$0xf]
        %v403 = vld [vmem:[#allocation7 + $0x18] sm:$0xf]
        %v404 = vld [vmem:[#allocation7 + $0x1c] sm:$0xf]
        %v405 = vld [vmem:[#allocation7 + $0x20] sm:$0xf]
        %v406 = vld [vmem:[#allocation7 + $0x24] sm:$0xf]
        %v407 = vld [vmem:[#allocation7 + $0x28] sm:$0xf]
        %v408 = vld [vmem:[#allocation7 + $0x2c] sm:$0xf]
        %v409 = vld [vmem:[#allocation7 + $0x30] sm:$0xf]
        %v410 = vld [vmem:[#allocation7 + $0x34] sm:$0xf]
        %v411 = vld [vmem:[#allocation7 + $0x38] sm:$0xf]
        %v412 = vld [vmem:[#allocation7 + $0x3c] sm:$0xf]
        %v429 = vunpack.c.l.b16 %v397
        %v430 = vunpack.c.l.b16 %v398
        %v431 = vunpack.c.l.b16 %v399
        %v432 = vunpack.c.l.b16 %v400
        %v433 = vunpack.c.l.b16 %v401
        %v434 = vunpack.c.l.b16 %v402
        %v435 = vunpack.c.l.b16 %v403
        %v436 = vunpack.c.l.b16 %v404
        %v437 = vunpack.c.l.b16 %v405
        %v438 = vunpack.c.l.b16 %v406
        %v439 = vunpack.c.l.b16 %v407
        %v440 = vunpack.c.l.b16 %v408
        %v441 = vunpack.c.l.b16 %v409
        %v442 = vunpack.c.l.b16 %v410
        %v443 = vunpack.c.l.b16 %v411
        %v444 = vunpack.c.l.b16 %v412
        %v445 = vpack.c.b16 %v430, %v429
        %v446 = vpack.c.b16 %v432, %v431
        %v447 = vpack.c.b16 %v434, %v433
        %v448 = vpack.c.b16 %v436, %v435
        %v449 = vpack.c.b16 %v438, %v437
        %v450 = vpack.c.b16 %v440, %v439
        %v451 = vpack.c.b16 %v442, %v441
        %v452 = vpack.c.b16 %v444, %v443
        %461 = vmatprep.subr.bf16.mxu0 0
        %462 = vmatpush1.bf16.msra.mxu0 %v452
        %463 = vmatprep.subr.bf16.mxu0 0
        %464 = vmatpush1.bf16.msra.mxu0 %v451
        %465 = vmatprep.subr.bf16.mxu0 0
        %466 = vmatpush1.bf16.msra.mxu0 %v450
        %467 = vmatprep.subr.bf16.mxu0 0
        %468 = vmatpush1.bf16.msra.mxu0 %v449
        %469 = vmatprep.subr.bf16.mxu0 0
        %470 = vmatpush1.bf16.msra.mxu0 %v448
        %471 = vmatprep.subr.bf16.mxu0 0
        %472 = vmatpush1.bf16.msra.mxu0 %v447
        %473 = vmatprep.subr.bf16.mxu0 0
        %474 = vmatpush1.bf16.msra.mxu0 %v446
        %475 = vmatprep.subr.bf16.mxu0 0
        %476 = vmatpush1.bf16.msra.mxu0 %v445
        %477 = vmatprep.subr.bf16.mxu0 0
        %478 = vmatpush2.bf16.msra.mxu0 0
        %479 = vmatprep.subr.bf16.mxu0 0
        %480 = vmatpush2.bf16.msra.mxu0 0
        %481 = vmatprep.subr.bf16.mxu0 0
        %482 = vmatpush2.bf16.msra.mxu0 0
        %483 = vmatprep.subr.bf16.mxu0 0
        %484 = vmatpush2.bf16.msra.mxu0 0
        %485 = vmatprep.subr.bf16.mxu0 0
        %486 = vmatpush2.bf16.msra.mxu0 0
        %487 = vmatprep.subr.bf16.mxu0 0
        %488 = vmatpush2.bf16.msra.mxu0 0
        %489 = vmatprep.subr.bf16.mxu0 0
        %490 = vmatpush2.bf16.msra.mxu0 0
        %491 = vmatprep.subr.bf16.mxu0 0
        %492 = vmatpush2.bf16.msra.mxu0 0
        %493 = vmatprep.mubr.bf16.mxu0 0
        %494 = vmatmul.mubr.bf16.gmra.mxu0 %v389
        %v495 = vpop.f32.mrf.mxu0
        %v496 = vadd.f32 0.0, %v495
        %v497 = vpop.f32.mrf.mxu0
        %v498 = vpop.f32.mrf.mxu0
        %v499 = vadd.f32 0.0, %v498
        %v500 = vpop.f32.mrf.mxu0
        %501 = vmatprep.mubr.bf16.mxu0 0
        %502 = vmatmul.mubr.bf16.gmra.mxu0 %v390
        %v503 = vpop.f32.mrf.mxu0
        %v504 = vadd.f32 0.0, %v503
        %v505 = vpop.f32.mrf.mxu0
        %v506 = vpop.f32.mrf.mxu0
        %v507 = vadd.f32 0.0, %v506
        %v508 = vpop.f32.mrf.mxu0
        %509 = vmatprep.mubr.bf16.mxu0 0
        %510 = vmatmul.mubr.bf16.gmra.mxu0 %v391
        %v511 = vpop.f32.mrf.mxu0
        %v512 = vadd.f32 0.0, %v511
        %v513 = vpop.f32.mrf.mxu0
        %v514 = vpop.f32.mrf.mxu0
        %v515 = vadd.f32 0.0, %v514
        %v516 = vpop.f32.mrf.mxu0
        %517 = vmatprep.mubr.bf16.mxu0 0
        %518 = vmatmul.mubr.bf16.gmra.mxu0 %v392
        %v519 = vpop.f32.mrf.mxu0
        %v520 = vadd.f32 0.0, %v519
        %v521 = vpop.f32.mrf.mxu0
        %v522 = vpop.f32.mrf.mxu0
        %v523 = vadd.f32 0.0, %v522
        %v524 = vpop.f32.mrf.mxu0
        %525 = vmatprep.mubr.bf16.mxu0 0
        %526 = vmatmul.mubr.bf16.gmra.mxu0 %v393
        %v527 = vpop.f32.mrf.mxu0
        %v528 = vadd.f32 0.0, %v527
        %v529 = vpop.f32.mrf.mxu0
        %v530 = vpop.f32.mrf.mxu0
        %v531 = vadd.f32 0.0, %v530
        %v532 = vpop.f32.mrf.mxu0
        %533 = vmatprep.mubr.bf16.mxu0 0
        %534 = vmatmul.mubr.bf16.gmra.mxu0 %v394
        %v535 = vpop.f32.mrf.mxu0
        %v536 = vadd.f32 0.0, %v535
        %v537 = vpop.f32.mrf.mxu0
        %v538 = vpop.f32.mrf.mxu0
        %v539 = vadd.f32 0.0, %v538
        %v540 = vpop.f32.mrf.mxu0
        %541 = vmatprep.mubr.bf16.mxu0 0
        %542 = vmatmul.mubr.bf16.gmra.mxu0 %v395
        %v543 = vpop.f32.mrf.mxu0
        %v544 = vadd.f32 0.0, %v543
        %v545 = vpop.f32.mrf.mxu0
        %v546 = vpop.f32.mrf.mxu0
        %v547 = vadd.f32 0.0, %v546
        %v548 = vpop.f32.mrf.mxu0
        %549 = vmatprep.mubr.bf16.mxu0 0
        %550 = vmatmul.mubr.bf16.gmra.mxu0 %v396
        %v551 = vpop.f32.mrf.mxu0
        %v552 = vadd.f32 0.0, %v551
        %v553 = vpop.f32.mrf.mxu0
        %v554 = vpop.f32.mrf.mxu0
        %v555 = vadd.f32 0.0, %v554
        %v556 = vpop.f32.mrf.mxu0
        %557 = vdwg.mxu0
        %574 = vrot.lane.b32.xlu0 %v496, 95
        %v575 = vpop.permute.xlu0 %574
        %576 = vrot.lane.b32.xlu0 %v499, 95
        %v577 = vpop.permute.xlu0 %576
        %578 = vrot.lane.b32.xlu0 %v504, 95
        %v579 = vpop.permute.xlu0 %578
        %580 = vrot.lane.b32.xlu0 %v507, 95
        %v581 = vpop.permute.xlu0 %580
        %582 = vrot.lane.b32.xlu0 %v512, 95
        %v583 = vpop.permute.xlu0 %582
        %584 = vrot.lane.b32.xlu0 %v515, 95
        %v585 = vpop.permute.xlu0 %584
        %586 = vrot.lane.b32.xlu0 %v520, 95
        %v587 = vpop.permute.xlu0 %586
        %588 = vrot.lane.b32.xlu0 %v523, 95
        %v589 = vpop.permute.xlu0 %588
        %590 = vrot.lane.b32.xlu0 %v528, 95
        %v591 = vpop.permute.xlu0 %590
        %592 = vrot.lane.b32.xlu0 %v531, 95
        %v593 = vpop.permute.xlu0 %592
        %594 = vrot.lane.b32.xlu0 %v536, 95
        %v595 = vpop.permute.xlu0 %594
        %596 = vrot.lane.b32.xlu0 %v539, 95
        %v597 = vpop.permute.xlu0 %596
        %598 = vrot.lane.b32.xlu0 %v544, 95
        %v599 = vpop.permute.xlu0 %598
        %600 = vrot.lane.b32.xlu0 %v547, 95
        %v601 = vpop.permute.xlu0 %600
        %602 = vrot.lane.b32.xlu0 %v552, 95
        %v603 = vpop.permute.xlu0 %602
        %604 = vrot.lane.b32.xlu0 %v555, 95
        %v605 = vpop.permute.xlu0 %604
        %622 = vxpose.xlu0.b32.start [1/16] %v575, 128
        %623 = vxpose.xlu0.b32.cont [2/16] %v577, 128
        %624 = vxpose.xlu0.b32.cont [3/16] %v579, 128
        %625 = vxpose.xlu0.b32.cont [4/16] %v581, 128
        %626 = vxpose.xlu0.b32.cont [5/16] %v583, 128
        %627 = vxpose.xlu0.b32.cont [6/16] %v585, 128
        %628 = vxpose.xlu0.b32.cont [7/16] %v587, 128
        %629 = vxpose.xlu0.b32.cont [8/16] %v589, 128
        %630 = vxpose.xlu0.b32.cont [9/16] %v591, 128
        %631 = vxpose.xlu0.b32.cont [10/16] %v593, 128
        %632 = vxpose.xlu0.b32.cont [11/16] %v595, 128
        %633 = vxpose.xlu0.b32.cont [12/16] %v597, 128
        %634 = vxpose.xlu0.b32.cont [13/16] %v599, 128
        %635 = vxpose.xlu0.b32.cont [14/16] %v601, 128
        %636 = vxpose.xlu0.b32.cont [15/16] %v603, 128
        %637 = vxpose.xlu0.b32.end [16/16] %v605, 128
        %v638 = vpop.trf.xlu0
        %v639 = vpop.trf.xlu0
        %v640 = vpop.trf.xlu0
        %v641 = vpop.trf.xlu0
        %v642 = vpop.trf.xlu0
        %v643 = vpop.trf.xlu0
        %v644 = vpop.trf.xlu0
        %v645 = vpop.trf.xlu0
        %v646 = vpop.trf.xlu0
        %v647 = vpop.trf.xlu0
        %v648 = vpop.trf.xlu0
        %v649 = vpop.trf.xlu0
        %v650 = vpop.trf.xlu0
        %v651 = vpop.trf.xlu0
        %v652 = vpop.trf.xlu0
        %v653 = vpop.trf.xlu0
        %654 = vset.pattern.permute.xlu0 32
        %655 = vperm.xlu0 %654, %v496
        %v656 = vpop.permute.xlu0 %655
        %658 = vset.pattern.permute.xlu0 32
        %659 = vperm.xlu0 %658, %v499
        %v660 = vpop.permute.xlu0 %659
        %662 = vset.pattern.permute.xlu0 32
        %663 = vperm.xlu0 %662, %v504
        %v664 = vpop.permute.xlu0 %663
        %666 = vset.pattern.permute.xlu0 32
        %667 = vperm.xlu0 %666, %v507
        %v668 = vpop.permute.xlu0 %667
        %670 = vset.pattern.permute.xlu0 32
        %671 = vperm.xlu0 %670, %v512
        %v672 = vpop.permute.xlu0 %671
        %674 = vset.pattern.permute.xlu0 32
        %675 = vperm.xlu0 %674, %v515
        %v676 = vpop.permute.xlu0 %675
        %678 = vset.pattern.permute.xlu0 32
        %679 = vperm.xlu0 %678, %v520
        %v680 = vpop.permute.xlu0 %679
        %682 = vset.pattern.permute.xlu0 32
        %683 = vperm.xlu0 %682, %v523
        %v684 = vpop.permute.xlu0 %683
        %686 = vset.pattern.permute.xlu0 32
        %687 = vperm.xlu0 %686, %v528
        %v688 = vpop.permute.xlu0 %687
        %690 = vset.pattern.permute.xlu0 32
        %691 = vperm.xlu0 %690, %v531
        %v692 = vpop.permute.xlu0 %691
        %694 = vset.pattern.permute.xlu0 32
        %695 = vperm.xlu0 %694, %v536
        %v696 = vpop.permute.xlu0 %695
        %698 = vset.pattern.permute.xlu0 32
        %699 = vperm.xlu0 %698, %v539
        %v700 = vpop.permute.xlu0 %699
        %702 = vset.pattern.permute.xlu0 32
        %703 = vperm.xlu0 %702, %v544
        %v704 = vpop.permute.xlu0 %703
        %706 = vset.pattern.permute.xlu0 32
        %707 = vperm.xlu0 %706, %v547
        %v708 = vpop.permute.xlu0 %707
        %710 = vset.pattern.permute.xlu0 32
        %711 = vperm.xlu0 %710, %v552
        %v712 = vpop.permute.xlu0 %711
        %714 = vset.pattern.permute.xlu0 32
        %715 = vperm.xlu0 %714, %v555
        %v716 = vpop.permute.xlu0 %715
        %v718 = vlaneseq
        %v719 = vshrl.u32 %v718, 7
        %v720 = vsub.s32 0, %v719
        %v721 = vrot.slane %v638, %v720
        %v722 = vadd.f32 %v656, %v721
        %v723 = vadd.f32 %v660, %v721
        %v724 = vadd.f32 %v664, %v721
        %v725 = vadd.f32 %v668, %v721
        %v726 = vadd.f32 %v672, %v721
        %v727 = vadd.f32 %v676, %v721
        %v728 = vadd.f32 %v680, %v721
        %v729 = vadd.f32 %v684, %v721
        %v730 = vadd.f32 %v688, %v721
        %v731 = vadd.f32 %v692, %v721
        %v732 = vadd.f32 %v696, %v721
        %v733 = vadd.f32 %v700, %v721
        %v734 = vadd.f32 %v704, %v721
        %v735 = vadd.f32 %v708, %v721
        %v736 = vadd.f32 %v712, %v721
        %v737 = vadd.f32 %v716, %v721
        %vm738 = vcmp.gt.f32.partialorder %v722, 0.0
        %vm739 = vcmp.gt.f32.partialorder %v723, 0.0
        %vm740 = vcmp.gt.f32.partialorder %v724, 0.0
        %vm741 = vcmp.gt.f32.partialorder %v725, 0.0
        %vm742 = vcmp.gt.f32.partialorder %v726, 0.0
        %vm743 = vcmp.gt.f32.partialorder %v727, 0.0
        %vm744 = vcmp.gt.f32.partialorder %v728, 0.0
        %vm745 = vcmp.gt.f32.partialorder %v729, 0.0
        %vm746 = vcmp.gt.f32.partialorder %v730, 0.0
        %vm747 = vcmp.gt.f32.partialorder %v731, 0.0
        %vm748 = vcmp.gt.f32.partialorder %v732, 0.0
        %vm749 = vcmp.gt.f32.partialorder %v733, 0.0
        %vm750 = vcmp.gt.f32.partialorder %v734, 0.0
        %vm751 = vcmp.gt.f32.partialorder %v735, 0.0
        %vm752 = vcmp.gt.f32.partialorder %v736, 0.0
        %vm753 = vcmp.gt.f32.partialorder %v737, 0.0
        %v754 = vmul.f32 %v722, 0.2
        %v755 = vmul.f32 %v723, 0.2
        %v756 = vmul.f32 %v724, 0.2
        %v757 = vmul.f32 %v725, 0.2
        %v758 = vmul.f32 %v726, 0.2
        %v759 = vmul.f32 %v727, 0.2
        %v760 = vmul.f32 %v728, 0.2
        %v761 = vmul.f32 %v729, 0.2
        %v762 = vmul.f32 %v730, 0.2
        %v763 = vmul.f32 %v731, 0.2
        %v764 = vmul.f32 %v732, 0.2
        %v765 = vmul.f32 %v733, 0.2
        %v766 = vmul.f32 %v734, 0.2
        %v767 = vmul.f32 %v735, 0.2
        %v768 = vmul.f32 %v736, 0.2
        %v769 = vmul.f32 %v737, 0.2
        %v770 = vsel %vm738, %v722, %v754
        %v771 = vsel %vm739, %v723, %v755
        %v772 = vsel %vm740, %v724, %v756
        %v773 = vsel %vm741, %v725, %v757
        %v774 = vsel %vm742, %v726, %v758
        %v775 = vsel %vm743, %v727, %v759
        %v776 = vsel %vm744, %v728, %v760
        %v777 = vsel %vm745, %v729, %v761
        %v778 = vsel %vm746, %v730, %v762
        %v779 = vsel %vm747, %v731, %v763
        %v780 = vsel %vm748, %v732, %v764
        %v781 = vsel %vm749, %v733, %v765
        %v782 = vsel %vm750, %v734, %v766
        %v783 = vsel %vm751, %v735, %v767
        %v784 = vsel %vm752, %v736, %v768
        %v785 = vsel %vm753, %v737, %v769
        %v786 = vsel %vm385, 16843009, 0
        %v787 = vsel %vm386, 16843009, 0
        %v788 = vsel %vm387, 16843009, 0
        %v789 = vsel %vm388, 16843009, 0
        %v790 = vunpack.c.0.s8 %v786
        %v791 = vunpack.c.1.s8 %v786
        %v792 = vunpack.c.2.s8 %v786
        %v793 = vunpack.c.3.s8 %v786
        %v794 = vunpack.c.0.s8 %v787
        %v795 = vunpack.c.1.s8 %v787
        %v796 = vunpack.c.2.s8 %v787
        %v797 = vunpack.c.3.s8 %v787
        %v798 = vunpack.c.0.s8 %v788
        %v799 = vunpack.c.1.s8 %v788
        %v800 = vunpack.c.2.s8 %v788
        %v801 = vunpack.c.3.s8 %v788
        %v802 = vunpack.c.0.s8 %v789
        %v803 = vunpack.c.1.s8 %v789
        %v804 = vunpack.c.2.s8 %v789
        %v805 = vunpack.c.3.s8 %v789
        %v806 = vpack.c.b16 %v790, %v790
        %v807 = vpack.c.b8 %v806, %v806
        %v808 = vpack.c.b16 %v791, %v791
        %v809 = vpack.c.b8 %v808, %v808
        %v810 = vpack.c.b16 %v792, %v792
        %v811 = vpack.c.b8 %v810, %v810
        %v812 = vpack.c.b16 %v793, %v793
        %v813 = vpack.c.b8 %v812, %v812
        %v814 = vpack.c.b16 %v794, %v794
        %v815 = vpack.c.b8 %v814, %v814
        %v816 = vpack.c.b16 %v795, %v795
        %v817 = vpack.c.b8 %v816, %v816
        %v818 = vpack.c.b16 %v796, %v796
        %v819 = vpack.c.b8 %v818, %v818
        %v820 = vpack.c.b16 %v797, %v797
        %v821 = vpack.c.b8 %v820, %v820
        %v822 = vpack.c.b16 %v798, %v798
        %v823 = vpack.c.b8 %v822, %v822
        %v824 = vpack.c.b16 %v799, %v799
        %v825 = vpack.c.b8 %v824, %v824
        %v826 = vpack.c.b16 %v800, %v800
        %v827 = vpack.c.b8 %v826, %v826
        %v828 = vpack.c.b16 %v801, %v801
        %v829 = vpack.c.b8 %v828, %v828
        %v830 = vpack.c.b16 %v802, %v802
        %v831 = vpack.c.b8 %v830, %v830
        %v832 = vpack.c.b16 %v803, %v803
        %v833 = vpack.c.b8 %v832, %v832
        %v834 = vpack.c.b16 %v804, %v804
        %v835 = vpack.c.b8 %v834, %v834
        %v836 = vpack.c.b16 %v805, %v805
        %v837 = vpack.c.b8 %v836, %v836
        %vm838 = vnez %v807
        %vm839 = vnez %v809
        %vm840 = vnez %v811
        %vm841 = vnez %v813
        %vm842 = vnez %v815
        %vm843 = vnez %v817
        %vm844 = vnez %v819
        %vm845 = vnez %v821
        %vm846 = vnez %v823
        %vm847 = vnez %v825
        %vm848 = vnez %v827
        %vm849 = vnez %v829
        %vm850 = vnez %v831
        %vm851 = vnez %v833
        %vm852 = vnez %v835
        %vm853 = vnez %v837
        %v854 = vsel %vm838, 16843009, 0
        %v855 = vsel %vm839, 16843009, 0
        %v856 = vsel %vm840, 16843009, 0
        %v857 = vsel %vm841, 16843009, 0
        %v858 = vsel %vm842, 16843009, 0
        %v859 = vsel %vm843, 16843009, 0
        %v860 = vsel %vm844, 16843009, 0
        %v861 = vsel %vm845, 16843009, 0
        %v862 = vsel %vm846, 16843009, 0
        %v863 = vsel %vm847, 16843009, 0
        %v864 = vsel %vm848, 16843009, 0
        %v865 = vsel %vm849, 16843009, 0
        %v866 = vsel %vm850, 16843009, 0
        %v867 = vsel %vm851, 16843009, 0
        %v868 = vsel %vm852, 16843009, 0
        %v869 = vsel %vm853, 16843009, 0
        %v870 = vunpack.c.0.s8 %v854
        %v871 = vunpack.c.0.s8 %v855
        %v872 = vunpack.c.0.s8 %v856
        %v873 = vunpack.c.0.s8 %v857
        %v874 = vunpack.c.0.s8 %v858
        %v875 = vunpack.c.0.s8 %v859
        %v876 = vunpack.c.0.s8 %v860
        %v877 = vunpack.c.0.s8 %v861
        %v878 = vunpack.c.0.s8 %v862
        %v879 = vunpack.c.0.s8 %v863
        %v880 = vunpack.c.0.s8 %v864
        %v881 = vunpack.c.0.s8 %v865
        %v882 = vunpack.c.0.s8 %v866
        %v883 = vunpack.c.0.s8 %v867
        %v884 = vunpack.c.0.s8 %v868
        %v885 = vunpack.c.0.s8 %v869
        %vm886 = vcmp.ne.s32.totalorder %v870, 0
        %vm887 = vcmp.ne.s32.totalorder %v871, 0
        %vm888 = vcmp.ne.s32.totalorder %v872, 0
        %vm889 = vcmp.ne.s32.totalorder %v873, 0
        %vm890 = vcmp.ne.s32.totalorder %v874, 0
        %vm891 = vcmp.ne.s32.totalorder %v875, 0
        %vm892 = vcmp.ne.s32.totalorder %v876, 0
        %vm893 = vcmp.ne.s32.totalorder %v877, 0
        %vm894 = vcmp.ne.s32.totalorder %v878, 0
        %vm895 = vcmp.ne.s32.totalorder %v879, 0
        %vm896 = vcmp.ne.s32.totalorder %v880, 0
        %vm897 = vcmp.ne.s32.totalorder %v881, 0
        %vm898 = vcmp.ne.s32.totalorder %v882, 0
        %vm899 = vcmp.ne.s32.totalorder %v883, 0
        %vm900 = vcmp.ne.s32.totalorder %v884, 0
        %vm901 = vcmp.ne.s32.totalorder %v885, 0
        %v902 = vsel %vm886, %v770, -1e+30
        %v903 = vsel %vm887, %v771, -1e+30
        %v904 = vsel %vm888, %v772, -1e+30
        %v905 = vsel %vm889, %v773, -1e+30
        %v906 = vsel %vm890, %v774, -1e+30
        %v907 = vsel %vm891, %v775, -1e+30
        %v908 = vsel %vm892, %v776, -1e+30
        %v909 = vsel %vm893, %v777, -1e+30
        %v910 = vsel %vm894, %v778, -1e+30
        %v911 = vsel %vm895, %v779, -1e+30
        %v912 = vsel %vm896, %v780, -1e+30
        %v913 = vsel %vm897, %v781, -1e+30
        %v914 = vsel %vm898, %v782, -1e+30
        %v915 = vsel %vm899, %v783, -1e+30
        %v916 = vsel %vm900, %v784, -1e+30
        %v917 = vsel %vm901, %v785, -1e+30
        %918 = vmax.xlane.f32.xlu0 %v902
        %v919 = vpop.xlane.xlu0 %918
        %920 = vmax.xlane.f32.xlu0 %v903
        %v921 = vpop.xlane.xlu0 %920
        %922 = vmax.xlane.f32.xlu0 %v904
        %v923 = vpop.xlane.xlu0 %922
        %924 = vmax.xlane.f32.xlu0 %v905
        %v925 = vpop.xlane.xlu0 %924
        %926 = vmax.xlane.f32.xlu0 %v906
        %v927 = vpop.xlane.xlu0 %926
        %928 = vmax.xlane.f32.xlu0 %v907
        %v929 = vpop.xlane.xlu0 %928
        %930 = vmax.xlane.f32.xlu0 %v908
        %v931 = vpop.xlane.xlu0 %930
        %932 = vmax.xlane.f32.xlu0 %v909
        %v933 = vpop.xlane.xlu0 %932
        %934 = vmax.xlane.f32.xlu0 %v910
        %v935 = vpop.xlane.xlu0 %934
        %936 = vmax.xlane.f32.xlu0 %v911
        %v937 = vpop.xlane.xlu0 %936
        %938 = vmax.xlane.f32.xlu0 %v912
        %v939 = vpop.xlane.xlu0 %938
        %940 = vmax.xlane.f32.xlu0 %v913
        %v941 = vpop.xlane.xlu0 %940
        %942 = vmax.xlane.f32.xlu0 %v914
        %v943 = vpop.xlane.xlu0 %942
        %944 = vmax.xlane.f32.xlu0 %v915
        %v945 = vpop.xlane.xlu0 %944
        %946 = vmax.xlane.f32.xlu0 %v916
        %v947 = vpop.xlane.xlu0 %946
        %948 = vmax.xlane.f32.xlu0 %v917
        %v949 = vpop.xlane.xlu0 %948
        %v950 = vsub.f32 %v902, %v919
        %v951 = vsub.f32 %v903, %v921
        %v952 = vsub.f32 %v904, %v923
        %v953 = vsub.f32 %v905, %v925
        %v954 = vsub.f32 %v906, %v927
        %v955 = vsub.f32 %v907, %v929
        %v956 = vsub.f32 %v908, %v931
        %v957 = vsub.f32 %v909, %v933
        %v958 = vsub.f32 %v910, %v935
        %v959 = vsub.f32 %v911, %v937
        %v960 = vsub.f32 %v912, %v939
        %v961 = vsub.f32 %v913, %v941
        %v962 = vsub.f32 %v914, %v943
        %v963 = vsub.f32 %v915, %v945
        %v964 = vsub.f32 %v916, %v947
        %v965 = vsub.f32 %v917, %v949
        %v966 = vmul.f32 %v950, 1.442695
        %v967 = vpow.pop %v966
        %v968 = vmul.f32 %v951, 1.442695
        %v969 = vpow.pop %v968
        %v970 = vmul.f32 %v952, 1.442695
        %v971 = vpow.pop %v970
        %v972 = vmul.f32 %v953, 1.442695
        %v973 = vpow.pop %v972
        %v974 = vmul.f32 %v954, 1.442695
        %v975 = vpow.pop %v974
        %v976 = vmul.f32 %v955, 1.442695
        %v977 = vpow.pop %v976
        %v978 = vmul.f32 %v956, 1.442695
        %v979 = vpow.pop %v978
        %v980 = vmul.f32 %v957, 1.442695
        %v981 = vpow.pop %v980
        %v982 = vmul.f32 %v958, 1.442695
        %v983 = vpow.pop %v982
        %v984 = vmul.f32 %v959, 1.442695
        %v985 = vpow.pop %v984
        %v986 = vmul.f32 %v960, 1.442695
        %v987 = vpow.pop %v986
        %v988 = vmul.f32 %v961, 1.442695
        %v989 = vpow.pop %v988
        %v990 = vmul.f32 %v962, 1.442695
        %v991 = vpow.pop %v990
        %v992 = vmul.f32 %v963, 1.442695
        %v993 = vpow.pop %v992
        %v994 = vmul.f32 %v964, 1.442695
        %v995 = vpow.pop %v994
        %v996 = vmul.f32 %v965, 1.442695
        %v997 = vpow.pop %v996
        %v998 = vsel %vm886, %v967, 0.0
        %v999 = vsel %vm887, %v969, 0.0
        %v1000 = vsel %vm888, %v971, 0.0
        %v1001 = vsel %vm889, %v973, 0.0
        %v1002 = vsel %vm890, %v975, 0.0
        %v1003 = vsel %vm891, %v977, 0.0
        %v1004 = vsel %vm892, %v979, 0.0
        %v1005 = vsel %vm893, %v981, 0.0
        %v1006 = vsel %vm894, %v983, 0.0
        %v1007 = vsel %vm895, %v985, 0.0
        %v1008 = vsel %vm896, %v987, 0.0
        %v1009 = vsel %vm897, %v989, 0.0
        %v1010 = vsel %vm898, %v991, 0.0
        %v1011 = vsel %vm899, %v993, 0.0
        %v1012 = vsel %vm900, %v995, 0.0
        %v1013 = vsel %vm901, %v997, 0.0
        %1014 = vadd.xlane.f32.xlu0 %v998
        %v1015 = vpop.xlane.xlu0 %1014
        %1016 = vadd.xlane.f32.xlu0 %v999
        %v1017 = vpop.xlane.xlu0 %1016
        %1018 = vadd.xlane.f32.xlu0 %v1000
        %v1019 = vpop.xlane.xlu0 %1018
        %1020 = vadd.xlane.f32.xlu0 %v1001
        %v1021 = vpop.xlane.xlu0 %1020
        %1022 = vadd.xlane.f32.xlu0 %v1002
        %v1023 = vpop.xlane.xlu0 %1022
        %1024 = vadd.xlane.f32.xlu0 %v1003
        %v1025 = vpop.xlane.xlu0 %1024
        %1026 = vadd.xlane.f32.xlu0 %v1004
        %v1027 = vpop.xlane.xlu0 %1026
        %1028 = vadd.xlane.f32.xlu0 %v1005
        %v1029 = vpop.xlane.xlu0 %1028
        %1030 = vadd.xlane.f32.xlu0 %v1006
        %v1031 = vpop.xlane.xlu0 %1030
        %1032 = vadd.xlane.f32.xlu0 %v1007
        %v1033 = vpop.xlane.xlu0 %1032
        %1034 = vadd.xlane.f32.xlu0 %v1008
        %v1035 = vpop.xlane.xlu0 %1034
        %1036 = vadd.xlane.f32.xlu0 %v1009
        %v1037 = vpop.xlane.xlu0 %1036
        %1038 = vadd.xlane.f32.xlu0 %v1010
        %v1039 = vpop.xlane.xlu0 %1038
        %1040 = vadd.xlane.f32.xlu0 %v1011
        %v1041 = vpop.xlane.xlu0 %1040
        %1042 = vadd.xlane.f32.xlu0 %v1012
        %v1043 = vpop.xlane.xlu0 %1042
        %1044 = vadd.xlane.f32.xlu0 %v1013
        %v1045 = vpop.xlane.xlu0 %1044
        %vm1046 = vcmp.gt.f32.partialorder %v1015, 0.0
        %vm1047 = vcmp.gt.f32.partialorder %v1017, 0.0
        %vm1048 = vcmp.gt.f32.partialorder %v1019, 0.0
        %vm1049 = vcmp.gt.f32.partialorder %v1021, 0.0
        %vm1050 = vcmp.gt.f32.partialorder %v1023, 0.0
        %vm1051 = vcmp.gt.f32.partialorder %v1025, 0.0
        %vm1052 = vcmp.gt.f32.partialorder %v1027, 0.0
        %vm1053 = vcmp.gt.f32.partialorder %v1029, 0.0
        %vm1054 = vcmp.gt.f32.partialorder %v1031, 0.0
        %vm1055 = vcmp.gt.f32.partialorder %v1033, 0.0
        %vm1056 = vcmp.gt.f32.partialorder %v1035, 0.0
        %vm1057 = vcmp.gt.f32.partialorder %v1037, 0.0
        %vm1058 = vcmp.gt.f32.partialorder %v1039, 0.0
        %vm1059 = vcmp.gt.f32.partialorder %v1041, 0.0
        %vm1060 = vcmp.gt.f32.partialorder %v1043, 0.0
        %vm1061 = vcmp.gt.f32.partialorder %v1045, 0.0
        %v1062 = vsel %vm1046, %v1015, 1.0
        %v1063 = vsel %vm1047, %v1017, 1.0
        %v1064 = vsel %vm1048, %v1019, 1.0
        %v1065 = vsel %vm1049, %v1021, 1.0
        %v1066 = vsel %vm1050, %v1023, 1.0
        %v1067 = vsel %vm1051, %v1025, 1.0
        %v1068 = vsel %vm1052, %v1027, 1.0
        %v1069 = vsel %vm1053, %v1029, 1.0
        %v1070 = vsel %vm1054, %v1031, 1.0
        %v1071 = vsel %vm1055, %v1033, 1.0
        %v1072 = vsel %vm1056, %v1035, 1.0
        %v1073 = vsel %vm1057, %v1037, 1.0
        %v1074 = vsel %vm1058, %v1039, 1.0
        %v1075 = vsel %vm1059, %v1041, 1.0
        %v1076 = vsel %vm1060, %v1043, 1.0
        %v1077 = vsel %vm1061, %v1045, 1.0
        %v1078 = vrcp.pop %v1062
        %v1079 = vrcp.pop %v1063
        %v1080 = vrcp.pop %v1064
        %v1081 = vrcp.pop %v1065
        %v1082 = vrcp.pop %v1066
        %v1083 = vrcp.pop %v1067
        %v1084 = vrcp.pop %v1068
        %v1085 = vrcp.pop %v1069
        %v1086 = vrcp.pop %v1070
        %v1087 = vrcp.pop %v1071
        %v1088 = vrcp.pop %v1072
        %v1089 = vrcp.pop %v1073
        %v1090 = vrcp.pop %v1074
        %v1091 = vrcp.pop %v1075
        %v1092 = vrcp.pop %v1076
        %v1093 = vrcp.pop %v1077
        %v1094 = vmul.f32 %v998, %v1078
        %v1095 = vmul.f32 %v999, %v1079
        %v1096 = vmul.f32 %v1000, %v1080
        %v1097 = vmul.f32 %v1001, %v1081
        %v1098 = vmul.f32 %v1002, %v1082
        %v1099 = vmul.f32 %v1003, %v1083
        %v1100 = vmul.f32 %v1004, %v1084
        %v1101 = vmul.f32 %v1005, %v1085
        %v1102 = vmul.f32 %v1006, %v1086
        %v1103 = vmul.f32 %v1007, %v1087
        %v1104 = vmul.f32 %v1008, %v1088
        %v1105 = vmul.f32 %v1009, %v1089
        %v1106 = vmul.f32 %v1010, %v1090
        %v1107 = vmul.f32 %v1011, %v1091
        %v1108 = vmul.f32 %v1012, %v1092
        %v1109 = vmul.f32 %v1013, %v1093
        %v1110 = vpack.c.bf16 %v1095, %v1094
        %v1111 = vpack.c.bf16 %v1097, %v1096
        %v1112 = vpack.c.bf16 %v1099, %v1098
        %v1113 = vpack.c.bf16 %v1101, %v1100
        %v1114 = vpack.c.bf16 %v1103, %v1102
        %v1115 = vpack.c.bf16 %v1105, %v1104
        %v1116 = vpack.c.bf16 %v1107, %v1106
        %v1117 = vpack.c.bf16 %v1109, %v1108
        %v1126 = vunpack.c.l.b16 %v1110
        %v1127 = vunpack.c.h.b16 %v1110
        %v1128 = vunpack.c.l.b16 %v1111
        %v1129 = vunpack.c.h.b16 %v1111
        %v1130 = vunpack.c.l.b16 %v1112
        %v1131 = vunpack.c.h.b16 %v1112
        %v1132 = vunpack.c.l.b16 %v1113
        %v1133 = vunpack.c.h.b16 %v1113
        %v1134 = vunpack.c.l.b16 %v1114
        %v1135 = vunpack.c.h.b16 %v1114
        %v1136 = vunpack.c.l.b16 %v1115
        %v1137 = vunpack.c.h.b16 %v1115
        %v1138 = vunpack.c.l.b16 %v1116
        %v1139 = vunpack.c.h.b16 %v1116
        %v1140 = vunpack.c.l.b16 %v1117
        %v1141 = vunpack.c.h.b16 %v1117
        %v1142 = vpack.c.b16 %v1126, %v1126
        %v1143 = vpack.c.b16 %v1127, %v1127
        %v1144 = vpack.c.b16 %v1128, %v1128
        %v1145 = vpack.c.b16 %v1129, %v1129
        %v1146 = vpack.c.b16 %v1130, %v1130
        %v1147 = vpack.c.b16 %v1131, %v1131
        %v1148 = vpack.c.b16 %v1132, %v1132
        %v1149 = vpack.c.b16 %v1133, %v1133
        %v1150 = vpack.c.b16 %v1134, %v1134
        %v1151 = vpack.c.b16 %v1135, %v1135
        %v1152 = vpack.c.b16 %v1136, %v1136
        %v1153 = vpack.c.b16 %v1137, %v1137
        %v1154 = vpack.c.b16 %v1138, %v1138
        %v1155 = vpack.c.b16 %v1139, %v1139
        %v1156 = vpack.c.b16 %v1140, %v1140
        %v1157 = vpack.c.b16 %v1141, %v1141
        %1174 = vst [vmem:[%s361] sm:$0xf] %v1142
        %1175 = vst [vmem:[%s361 + $0x4] sm:$0xf] %v1143
        %1176 = vst [vmem:[%s361 + $0x8] sm:$0xf] %v1144
        %1177 = vst [vmem:[%s361 + $0xc] sm:$0xf] %v1145
        %1178 = vst [vmem:[%s361 + $0x10] sm:$0xf] %v1146
        %1179 = vst [vmem:[%s361 + $0x14] sm:$0xf] %v1147
        %1180 = vst [vmem:[%s361 + $0x18] sm:$0xf] %v1148
        %1181 = vst [vmem:[%s361 + $0x1c] sm:$0xf] %v1149
        %1182 = vst [vmem:[%s361 + $0x20] sm:$0xf] %v1150
        %1183 = vst [vmem:[%s361 + $0x24] sm:$0xf] %v1151
        %1184 = vst [vmem:[%s361 + $0x28] sm:$0xf] %v1152
        %1185 = vst [vmem:[%s361 + $0x2c] sm:$0xf] %v1153
        %1186 = vst [vmem:[%s361 + $0x30] sm:$0xf] %v1154
        %1187 = vst [vmem:[%s361 + $0x34] sm:$0xf] %v1155
        %1188 = vst [vmem:[%s361 + $0x38] sm:$0xf] %v1156
        %1189 = vst [vmem:[%s361 + $0x3c] sm:$0xf] %v1157
        %v1190 = vpack.c.bf16 %v499, %v496
        %v1191 = vpack.c.bf16 %v507, %v504
        %v1192 = vpack.c.bf16 %v515, %v512
        %v1193 = vpack.c.bf16 %v523, %v520
        %v1194 = vpack.c.bf16 %v531, %v528
        %v1195 = vpack.c.bf16 %v539, %v536
        %v1196 = vpack.c.bf16 %v547, %v544
        %v1197 = vpack.c.bf16 %v555, %v552
        %v1198 = vld [vmem:[%s5] sm:$0x1]
        %v1200 = vlaneseq
        %v1201 = vshrl.u32 %v1200, 7
        %v1202 = vsub.s32 0, %v1201
        %v1203 = vrot.slane %v1198, %v1202
        %1205 = vmatprep.subr.bf16.mxu0 0
        %1206 = vmatpush1.bf16.msra.mxu0 %v1197
        %1207 = vmatprep.subr.bf16.mxu0 0
        %1208 = vmatpush1.bf16.msra.mxu0 %v1196
        %1209 = vmatprep.subr.bf16.mxu0 0
        %1210 = vmatpush1.bf16.msra.mxu0 %v1195
        %1211 = vmatprep.subr.bf16.mxu0 0
        %1212 = vmatpush1.bf16.msra.mxu0 %v1194
        %1213 = vmatprep.subr.bf16.mxu0 0
        %1214 = vmatpush1.bf16.msra.mxu0 %v1193
        %1215 = vmatprep.subr.bf16.mxu0 0
        %1216 = vmatpush1.bf16.msra.mxu0 %v1192
        %1217 = vmatprep.subr.bf16.mxu0 0
        %1218 = vmatpush1.bf16.msra.mxu0 %v1191
        %1219 = vmatprep.subr.bf16.mxu0 0
        %1220 = vmatpush1.bf16.msra.mxu0 %v1190
        %1221 = vmatprep.subr.bf16.mxu0 0
        %1222 = vmatpush2.bf16.msra.mxu0 0
        %1223 = vmatprep.subr.bf16.mxu0 0
        %1224 = vmatpush2.bf16.msra.mxu0 0
        %1225 = vmatprep.subr.bf16.mxu0 0
        %1226 = vmatpush2.bf16.msra.mxu0 0
        %1227 = vmatprep.subr.bf16.mxu0 0
        %1228 = vmatpush2.bf16.msra.mxu0 0
        %1229 = vmatprep.subr.bf16.mxu0 0
        %1230 = vmatpush2.bf16.msra.mxu0 0
        %1231 = vmatprep.subr.bf16.mxu0 0
        %1232 = vmatpush2.bf16.msra.mxu0 0
        %1233 = vmatprep.subr.bf16.mxu0 0
        %1234 = vmatpush2.bf16.msra.mxu0 0
        %1235 = vmatprep.subr.bf16.mxu0 0
        %1236 = vmatpush2.bf16.msra.mxu0 0
        %1237 = vmatprep.mubr.bf16.mxu0 0
        %1238 = vmatmul.mubr.bf16.gmra.mxu0 %v1110
        %v1239 = vpop.f32.mrf.mxu0
        %v1240 = vadd.f32 %v1203, %v1239
        %v1241 = vpop.f32.mrf.mxu0
        %v1242 = vpop.f32.mrf.mxu0
        %v1243 = vadd.f32 %v1203, %v1242
        %v1244 = vpop.f32.mrf.mxu0
        %1245 = vmatprep.mubr.bf16.mxu0 0
        %1246 = vmatmul.mubr.bf16.gmra.mxu0 %v1111
        %v1247 = vpop.f32.mrf.mxu0
        %v1248 = vadd.f32 %v1203, %v1247
        %v1249 = vpop.f32.mrf.mxu0
        %v1250 = vpop.f32.mrf.mxu0
        %v1251 = vadd.f32 %v1203, %v1250
        %v1252 = vpop.f32.mrf.mxu0
        %1253 = vmatprep.mubr.bf16.mxu0 0
        %1254 = vmatmul.mubr.bf16.gmra.mxu0 %v1112
        %v1255 = vpop.f32.mrf.mxu0
        %v1256 = vadd.f32 %v1203, %v1255
        %v1257 = vpop.f32.mrf.mxu0
        %v1258 = vpop.f32.mrf.mxu0
        %v1259 = vadd.f32 %v1203, %v1258
        %v1260 = vpop.f32.mrf.mxu0
        %1261 = vmatprep.mubr.bf16.mxu0 0
        %1262 = vmatmul.mubr.bf16.gmra.mxu0 %v1113
        %v1263 = vpop.f32.mrf.mxu0
        %v1264 = vadd.f32 %v1203, %v1263
        %v1265 = vpop.f32.mrf.mxu0
        %v1266 = vpop.f32.mrf.mxu0
        %v1267 = vadd.f32 %v1203, %v1266
        %v1268 = vpop.f32.mrf.mxu0
        %1269 = vmatprep.mubr.bf16.mxu0 0
        %1270 = vmatmul.mubr.bf16.gmra.mxu0 %v1114
        %v1271 = vpop.f32.mrf.mxu0
        %v1272 = vadd.f32 %v1203, %v1271
        %v1273 = vpop.f32.mrf.mxu0
        %v1274 = vpop.f32.mrf.mxu0
        %v1275 = vadd.f32 %v1203, %v1274
        %v1276 = vpop.f32.mrf.mxu0
        %1277 = vmatprep.mubr.bf16.mxu0 0
        %1278 = vmatmul.mubr.bf16.gmra.mxu0 %v1115
        %v1279 = vpop.f32.mrf.mxu0
        %v1280 = vadd.f32 %v1203, %v1279
        %v1281 = vpop.f32.mrf.mxu0
        %v1282 = vpop.f32.mrf.mxu0
        %v1283 = vadd.f32 %v1203, %v1282
        %v1284 = vpop.f32.mrf.mxu0
        %1285 = vmatprep.mubr.bf16.mxu0 0
        %1286 = vmatmul.mubr.bf16.gmra.mxu0 %v1116
        %v1287 = vpop.f32.mrf.mxu0
        %v1288 = vadd.f32 %v1203, %v1287
        %v1289 = vpop.f32.mrf.mxu0
        %v1290 = vpop.f32.mrf.mxu0
        %v1291 = vadd.f32 %v1203, %v1290
        %v1292 = vpop.f32.mrf.mxu0
        %1293 = vmatprep.mubr.bf16.mxu0 0
        %1294 = vmatmul.mubr.bf16.gmra.mxu0 %v1117
        %v1295 = vpop.f32.mrf.mxu0
        %v1296 = vadd.f32 %v1203, %v1295
        %v1297 = vpop.f32.mrf.mxu0
        %v1298 = vpop.f32.mrf.mxu0
        %v1299 = vadd.f32 %v1203, %v1298
        %v1300 = vpop.f32.mrf.mxu0
        %1301 = vdwg.mxu0
        %v1302 = vadd.f32 %v365, %v1240
        %v1303 = vadd.f32 %v366, %v1243
        %v1304 = vadd.f32 %v367, %v1248
        %v1305 = vadd.f32 %v368, %v1251
        %v1306 = vadd.f32 %v369, %v1256
        %v1307 = vadd.f32 %v370, %v1259
        %v1308 = vadd.f32 %v371, %v1264
        %v1309 = vadd.f32 %v372, %v1267
        %v1310 = vadd.f32 %v373, %v1272
        %v1311 = vadd.f32 %v374, %v1275
        %v1312 = vadd.f32 %v375, %v1280
        %v1313 = vadd.f32 %v376, %v1283
        %v1314 = vadd.f32 %v377, %v1288
        %v1315 = vadd.f32 %v378, %v1291
        %v1316 = vadd.f32 %v379, %v1296
        %v1317 = vadd.f32 %v380, %v1299
        %v1318 = vmax.f32 %v1302, 0.0
        %v1319 = vmax.f32 %v1303, 0.0
        %v1320 = vmax.f32 %v1304, 0.0
        %v1321 = vmax.f32 %v1305, 0.0
        %v1322 = vmax.f32 %v1306, 0.0
        %v1323 = vmax.f32 %v1307, 0.0
        %v1324 = vmax.f32 %v1308, 0.0
        %v1325 = vmax.f32 %v1309, 0.0
        %v1326 = vmax.f32 %v1310, 0.0
        %v1327 = vmax.f32 %v1311, 0.0
        %v1328 = vmax.f32 %v1312, 0.0
        %v1329 = vmax.f32 %v1313, 0.0
        %v1330 = vmax.f32 %v1314, 0.0
        %v1331 = vmax.f32 %v1315, 0.0
        %v1332 = vmax.f32 %v1316, 0.0
        %v1333 = vmax.f32 %v1317, 0.0
        %v1334 = vpack.c.bf16 %v1319, %v1318
        %v1335 = vpack.c.bf16 %v1321, %v1320
        %v1336 = vpack.c.bf16 %v1323, %v1322
        %v1337 = vpack.c.bf16 %v1325, %v1324
        %v1338 = vpack.c.bf16 %v1327, %v1326
        %v1339 = vpack.c.bf16 %v1329, %v1328
        %v1340 = vpack.c.bf16 %v1331, %v1330
        %v1341 = vpack.c.bf16 %v1333, %v1332
        %s1342 = scalar_lea.vmem [#allocation7], 64
        %v1343 = vld [vmem:[%s1342] sm:$0xf]
        %v1344 = vld [vmem:[%s1342 + $0x4] sm:$0xf]
        %v1345 = vld [vmem:[%s1342 + $0x8] sm:$0xf]
        %v1346 = vld [vmem:[%s1342 + $0xc] sm:$0xf]
        %v1347 = vld [vmem:[%s1342 + $0x10] sm:$0xf]
        %v1348 = vld [vmem:[%s1342 + $0x14] sm:$0xf]
        %v1349 = vld [vmem:[%s1342 + $0x18] sm:$0xf]
        %v1350 = vld [vmem:[%s1342 + $0x1c] sm:$0xf]
        %v1351 = vld [vmem:[%s1342 + $0x20] sm:$0xf]
        %v1352 = vld [vmem:[%s1342 + $0x24] sm:$0xf]
        %v1353 = vld [vmem:[%s1342 + $0x28] sm:$0xf]
        %v1354 = vld [vmem:[%s1342 + $0x2c] sm:$0xf]
        %v1355 = vld [vmem:[%s1342 + $0x30] sm:$0xf]
        %v1356 = vld [vmem:[%s1342 + $0x34] sm:$0xf]
        %v1357 = vld [vmem:[%s1342 + $0x38] sm:$0xf]
        %v1358 = vld [vmem:[%s1342 + $0x3c] sm:$0xf]
        %v1375 = vunpack.c.l.b16 %v1343
        %v1376 = vunpack.c.l.b16 %v1344
        %v1377 = vunpack.c.l.b16 %v1345
        %v1378 = vunpack.c.l.b16 %v1346
        %v1379 = vunpack.c.l.b16 %v1347
        %v1380 = vunpack.c.l.b16 %v1348
        %v1381 = vunpack.c.l.b16 %v1349
        %v1382 = vunpack.c.l.b16 %v1350
        %v1383 = vunpack.c.l.b16 %v1351
        %v1384 = vunpack.c.l.b16 %v1352
        %v1385 = vunpack.c.l.b16 %v1353
        %v1386 = vunpack.c.l.b16 %v1354
        %v1387 = vunpack.c.l.b16 %v1355
        %v1388 = vunpack.c.l.b16 %v1356
        %v1389 = vunpack.c.l.b16 %v1357
        %v1390 = vunpack.c.l.b16 %v1358
        %v1391 = vpack.c.b16 %v1376, %v1375
        %v1392 = vpack.c.b16 %v1378, %v1377
        %v1393 = vpack.c.b16 %v1380, %v1379
        %v1394 = vpack.c.b16 %v1382, %v1381
        %v1395 = vpack.c.b16 %v1384, %v1383
        %v1396 = vpack.c.b16 %v1386, %v1385
        %v1397 = vpack.c.b16 %v1388, %v1387
        %v1398 = vpack.c.b16 %v1390, %v1389
        %1407 = vmatprep.subr.bf16.mxu0 0
        %1408 = vmatpush1.bf16.msra.mxu0 %v1398
        %1409 = vmatprep.subr.bf16.mxu0 0
        %1410 = vmatpush1.bf16.msra.mxu0 %v1397
        %1411 = vmatprep.subr.bf16.mxu0 0
        %1412 = vmatpush1.bf16.msra.mxu0 %v1396
        %1413 = vmatprep.subr.bf16.mxu0 0
        %1414 = vmatpush1.bf16.msra.mxu0 %v1395
        %1415 = vmatprep.subr.bf16.mxu0 0
        %1416 = vmatpush1.bf16.msra.mxu0 %v1394
        %1417 = vmatprep.subr.bf16.mxu0 0
        %1418 = vmatpush1.bf16.msra.mxu0 %v1393
        %1419 = vmatprep.subr.bf16.mxu0 0
        %1420 = vmatpush1.bf16.msra.mxu0 %v1392
        %1421 = vmatprep.subr.bf16.mxu0 0
        %1422 = vmatpush1.bf16.msra.mxu0 %v1391
        %1423 = vmatprep.subr.bf16.mxu0 0
        %1424 = vmatpush2.bf16.msra.mxu0 0
        %1425 = vmatprep.subr.bf16.mxu0 0
        %1426 = vmatpush2.bf16.msra.mxu0 0
        %1427 = vmatprep.subr.bf16.mxu0 0
        %1428 = vmatpush2.bf16.msra.mxu0 0
        %1429 = vmatprep.subr.bf16.mxu0 0
        %1430 = vmatpush2.bf16.msra.mxu0 0
        %1431 = vmatprep.subr.bf16.mxu0 0
        %1432 = vmatpush2.bf16.msra.mxu0 0
        %1433 = vmatprep.subr.bf16.mxu0 0
        %1434 = vmatpush2.bf16.msra.mxu0 0
        %1435 = vmatprep.subr.bf16.mxu0 0
        %1436 = vmatpush2.bf16.msra.mxu0 0
        %1437 = vmatprep.subr.bf16.mxu0 0
        %1438 = vmatpush2.bf16.msra.mxu0 0
        %1439 = vmatprep.mubr.bf16.mxu0 0
        %1440 = vmatmul.mubr.bf16.gmra.mxu0 %v1334
        %v1441 = vpop.f32.mrf.mxu0
        %v1442 = vadd.f32 0.0, %v1441
        %v1443 = vpop.f32.mrf.mxu0
        %v1444 = vpop.f32.mrf.mxu0
        %v1445 = vadd.f32 0.0, %v1444
        %v1446 = vpop.f32.mrf.mxu0
        %1447 = vmatprep.mubr.bf16.mxu0 0
        %1448 = vmatmul.mubr.bf16.gmra.mxu0 %v1335
        %v1449 = vpop.f32.mrf.mxu0
        %v1450 = vadd.f32 0.0, %v1449
        %v1451 = vpop.f32.mrf.mxu0
        %v1452 = vpop.f32.mrf.mxu0
        %v1453 = vadd.f32 0.0, %v1452
        %v1454 = vpop.f32.mrf.mxu0
        %1455 = vmatprep.mubr.bf16.mxu0 0
        %1456 = vmatmul.mubr.bf16.gmra.mxu0 %v1336
        %v1457 = vpop.f32.mrf.mxu0
        %v1458 = vadd.f32 0.0, %v1457
        %v1459 = vpop.f32.mrf.mxu0
        %v1460 = vpop.f32.mrf.mxu0
        %v1461 = vadd.f32 0.0, %v1460
        %v1462 = vpop.f32.mrf.mxu0
        %1463 = vmatprep.mubr.bf16.mxu0 0
        %1464 = vmatmul.mubr.bf16.gmra.mxu0 %v1337
        %v1465 = vpop.f32.mrf.mxu0
        %v1466 = vadd.f32 0.0, %v1465
        %v1467 = vpop.f32.mrf.mxu0
        %v1468 = vpop.f32.mrf.mxu0
        %v1469 = vadd.f32 0.0, %v1468
        %v1470 = vpop.f32.mrf.mxu0
        %1471 = vmatprep.mubr.bf16.mxu0 0
        %1472 = vmatmul.mubr.bf16.gmra.mxu0 %v1338
        %v1473 = vpop.f32.mrf.mxu0
        %v1474 = vadd.f32 0.0, %v1473
        %v1475 = vpop.f32.mrf.mxu0
        %v1476 = vpop.f32.mrf.mxu0
        %v1477 = vadd.f32 0.0, %v1476
        %v1478 = vpop.f32.mrf.mxu0
        %1479 = vmatprep.mubr.bf16.mxu0 0
        %1480 = vmatmul.mubr.bf16.gmra.mxu0 %v1339
        %v1481 = vpop.f32.mrf.mxu0
        %v1482 = vadd.f32 0.0, %v1481
        %v1483 = vpop.f32.mrf.mxu0
        %v1484 = vpop.f32.mrf.mxu0
        %v1485 = vadd.f32 0.0, %v1484
        %v1486 = vpop.f32.mrf.mxu0
        %1487 = vmatprep.mubr.bf16.mxu0 0
        %1488 = vmatmul.mubr.bf16.gmra.mxu0 %v1340
        %v1489 = vpop.f32.mrf.mxu0
        %v1490 = vadd.f32 0.0, %v1489
        %v1491 = vpop.f32.mrf.mxu0
        %v1492 = vpop.f32.mrf.mxu0
        %v1493 = vadd.f32 0.0, %v1492
        %v1494 = vpop.f32.mrf.mxu0
        %1495 = vmatprep.mubr.bf16.mxu0 0
        %1496 = vmatmul.mubr.bf16.gmra.mxu0 %v1341
        %v1497 = vpop.f32.mrf.mxu0
        %v1498 = vadd.f32 0.0, %v1497
        %v1499 = vpop.f32.mrf.mxu0
        %v1500 = vpop.f32.mrf.mxu0
        %v1501 = vadd.f32 0.0, %v1500
        %v1502 = vpop.f32.mrf.mxu0
        %1503 = vdwg.mxu0
        %1520 = vrot.lane.b32.xlu0 %v1442, 95
        %v1521 = vpop.permute.xlu0 %1520
        %1522 = vrot.lane.b32.xlu0 %v1445, 95
        %v1523 = vpop.permute.xlu0 %1522
        %1524 = vrot.lane.b32.xlu0 %v1450, 95
        %v1525 = vpop.permute.xlu0 %1524
        %1526 = vrot.lane.b32.xlu0 %v1453, 95
        %v1527 = vpop.permute.xlu0 %1526
        %1528 = vrot.lane.b32.xlu0 %v1458, 95
        %v1529 = vpop.permute.xlu0 %1528
        %1530 = vrot.lane.b32.xlu0 %v1461, 95
        %v1531 = vpop.permute.xlu0 %1530
        %1532 = vrot.lane.b32.xlu0 %v1466, 95
        %v1533 = vpop.permute.xlu0 %1532
        %1534 = vrot.lane.b32.xlu0 %v1469, 95
        %v1535 = vpop.permute.xlu0 %1534
        %1536 = vrot.lane.b32.xlu0 %v1474, 95
        %v1537 = vpop.permute.xlu0 %1536
        %1538 = vrot.lane.b32.xlu0 %v1477, 95
        %v1539 = vpop.permute.xlu0 %1538
        %1540 = vrot.lane.b32.xlu0 %v1482, 95
        %v1541 = vpop.permute.xlu0 %1540
        %1542 = vrot.lane.b32.xlu0 %v1485, 95
        %v1543 = vpop.permute.xlu0 %1542
        %1544 = vrot.lane.b32.xlu0 %v1490, 95
        %v1545 = vpop.permute.xlu0 %1544
        %1546 = vrot.lane.b32.xlu0 %v1493, 95
        %v1547 = vpop.permute.xlu0 %1546
        %1548 = vrot.lane.b32.xlu0 %v1498, 95
        %v1549 = vpop.permute.xlu0 %1548
        %1550 = vrot.lane.b32.xlu0 %v1501, 95
        %v1551 = vpop.permute.xlu0 %1550
        %1568 = vxpose.xlu0.b32.start [1/16] %v1521, 128
        %1569 = vxpose.xlu0.b32.cont [2/16] %v1523, 128
        %1570 = vxpose.xlu0.b32.cont [3/16] %v1525, 128
        %1571 = vxpose.xlu0.b32.cont [4/16] %v1527, 128
        %1572 = vxpose.xlu0.b32.cont [5/16] %v1529, 128
        %1573 = vxpose.xlu0.b32.cont [6/16] %v1531, 128
        %1574 = vxpose.xlu0.b32.cont [7/16] %v1533, 128
        %1575 = vxpose.xlu0.b32.cont [8/16] %v1535, 128
        %1576 = vxpose.xlu0.b32.cont [9/16] %v1537, 128
        %1577 = vxpose.xlu0.b32.cont [10/16] %v1539, 128
        %1578 = vxpose.xlu0.b32.cont [11/16] %v1541, 128
        %1579 = vxpose.xlu0.b32.cont [12/16] %v1543, 128
        %1580 = vxpose.xlu0.b32.cont [13/16] %v1545, 128
        %1581 = vxpose.xlu0.b32.cont [14/16] %v1547, 128
        %1582 = vxpose.xlu0.b32.cont [15/16] %v1549, 128
        %1583 = vxpose.xlu0.b32.end [16/16] %v1551, 128
        %v1584 = vpop.trf.xlu0
        %v1585 = vpop.trf.xlu0
        %v1586 = vpop.trf.xlu0
        %v1587 = vpop.trf.xlu0
        %v1588 = vpop.trf.xlu0
        %v1589 = vpop.trf.xlu0
        %v1590 = vpop.trf.xlu0
        %v1591 = vpop.trf.xlu0
        %v1592 = vpop.trf.xlu0
        %v1593 = vpop.trf.xlu0
        %v1594 = vpop.trf.xlu0
        %v1595 = vpop.trf.xlu0
        %v1596 = vpop.trf.xlu0
        %v1597 = vpop.trf.xlu0
        %v1598 = vpop.trf.xlu0
        %v1599 = vpop.trf.xlu0
        %1600 = vset.pattern.permute.xlu0 32
        %1601 = vperm.xlu0 %1600, %v1442
        %v1602 = vpop.permute.xlu0 %1601
        %1604 = vset.pattern.permute.xlu0 32
        %1605 = vperm.xlu0 %1604, %v1445
        %v1606 = vpop.permute.xlu0 %1605
        %1608 = vset.pattern.permute.xlu0 32
        %1609 = vperm.xlu0 %1608, %v1450
        %v1610 = vpop.permute.xlu0 %1609
        %1612 = vset.pattern.permute.xlu0 32
        %1613 = vperm.xlu0 %1612, %v1453
        %v1614 = vpop.permute.xlu0 %1613
        %1616 = vset.pattern.permute.xlu0 32
        %1617 = vperm.xlu0 %1616, %v1458
        %v1618 = vpop.permute.xlu0 %1617
        %1620 = vset.pattern.permute.xlu0 32
        %1621 = vperm.xlu0 %1620, %v1461
        %v1622 = vpop.permute.xlu0 %1621
        %1624 = vset.pattern.permute.xlu0 32
        %1625 = vperm.xlu0 %1624, %v1466
        %v1626 = vpop.permute.xlu0 %1625
        %1628 = vset.pattern.permute.xlu0 32
        %1629 = vperm.xlu0 %1628, %v1469
        %v1630 = vpop.permute.xlu0 %1629
        %1632 = vset.pattern.permute.xlu0 32
        %1633 = vperm.xlu0 %1632, %v1474
        %v1634 = vpop.permute.xlu0 %1633
        %1636 = vset.pattern.permute.xlu0 32
        %1637 = vperm.xlu0 %1636, %v1477
        %v1638 = vpop.permute.xlu0 %1637
        %1640 = vset.pattern.permute.xlu0 32
        %1641 = vperm.xlu0 %1640, %v1482
        %v1642 = vpop.permute.xlu0 %1641
        %1644 = vset.pattern.permute.xlu0 32
        %1645 = vperm.xlu0 %1644, %v1485
        %v1646 = vpop.permute.xlu0 %1645
        %1648 = vset.pattern.permute.xlu0 32
        %1649 = vperm.xlu0 %1648, %v1490
        %v1650 = vpop.permute.xlu0 %1649
        %1652 = vset.pattern.permute.xlu0 32
        %1653 = vperm.xlu0 %1652, %v1493
        %v1654 = vpop.permute.xlu0 %1653
        %1656 = vset.pattern.permute.xlu0 32
        %1657 = vperm.xlu0 %1656, %v1498
        %v1658 = vpop.permute.xlu0 %1657
        %1660 = vset.pattern.permute.xlu0 32
        %1661 = vperm.xlu0 %1660, %v1501
        %v1662 = vpop.permute.xlu0 %1661
        %v1664 = vlaneseq
        %v1665 = vshrl.u32 %v1664, 7
        %v1666 = vsub.s32 0, %v1665
        %v1667 = vrot.slane %v1584, %v1666
        %v1668 = vadd.f32 %v1602, %v1667
        %v1669 = vadd.f32 %v1606, %v1667
        %v1670 = vadd.f32 %v1610, %v1667
        %v1671 = vadd.f32 %v1614, %v1667
        %v1672 = vadd.f32 %v1618, %v1667
        %v1673 = vadd.f32 %v1622, %v1667
        %v1674 = vadd.f32 %v1626, %v1667
        %v1675 = vadd.f32 %v1630, %v1667
        %v1676 = vadd.f32 %v1634, %v1667
        %v1677 = vadd.f32 %v1638, %v1667
        %v1678 = vadd.f32 %v1642, %v1667
        %v1679 = vadd.f32 %v1646, %v1667
        %v1680 = vadd.f32 %v1650, %v1667
        %v1681 = vadd.f32 %v1654, %v1667
        %v1682 = vadd.f32 %v1658, %v1667
        %v1683 = vadd.f32 %v1662, %v1667
        %vm1684 = vcmp.gt.f32.partialorder %v1668, 0.0
        %vm1685 = vcmp.gt.f32.partialorder %v1669, 0.0
        %vm1686 = vcmp.gt.f32.partialorder %v1670, 0.0
        %vm1687 = vcmp.gt.f32.partialorder %v1671, 0.0
        %vm1688 = vcmp.gt.f32.partialorder %v1672, 0.0
        %vm1689 = vcmp.gt.f32.partialorder %v1673, 0.0
        %vm1690 = vcmp.gt.f32.partialorder %v1674, 0.0
        %vm1691 = vcmp.gt.f32.partialorder %v1675, 0.0
        %vm1692 = vcmp.gt.f32.partialorder %v1676, 0.0
        %vm1693 = vcmp.gt.f32.partialorder %v1677, 0.0
        %vm1694 = vcmp.gt.f32.partialorder %v1678, 0.0
        %vm1695 = vcmp.gt.f32.partialorder %v1679, 0.0
        %vm1696 = vcmp.gt.f32.partialorder %v1680, 0.0
        %vm1697 = vcmp.gt.f32.partialorder %v1681, 0.0
        %vm1698 = vcmp.gt.f32.partialorder %v1682, 0.0
        %vm1699 = vcmp.gt.f32.partialorder %v1683, 0.0
        %v1700 = vmul.f32 %v1668, 0.2
        %v1701 = vmul.f32 %v1669, 0.2
        %v1702 = vmul.f32 %v1670, 0.2
        %v1703 = vmul.f32 %v1671, 0.2
        %v1704 = vmul.f32 %v1672, 0.2
        %v1705 = vmul.f32 %v1673, 0.2
        %v1706 = vmul.f32 %v1674, 0.2
        %v1707 = vmul.f32 %v1675, 0.2
        %v1708 = vmul.f32 %v1676, 0.2
        %v1709 = vmul.f32 %v1677, 0.2
        %v1710 = vmul.f32 %v1678, 0.2
        %v1711 = vmul.f32 %v1679, 0.2
        %v1712 = vmul.f32 %v1680, 0.2
        %v1713 = vmul.f32 %v1681, 0.2
        %v1714 = vmul.f32 %v1682, 0.2
        %v1715 = vmul.f32 %v1683, 0.2
        %v1716 = vsel %vm1684, %v1668, %v1700
        %v1717 = vsel %vm1685, %v1669, %v1701
        %v1718 = vsel %vm1686, %v1670, %v1702
        %v1719 = vsel %vm1687, %v1671, %v1703
        %v1720 = vsel %vm1688, %v1672, %v1704
        %v1721 = vsel %vm1689, %v1673, %v1705
        %v1722 = vsel %vm1690, %v1674, %v1706
        %v1723 = vsel %vm1691, %v1675, %v1707
        %v1724 = vsel %vm1692, %v1676, %v1708
        %v1725 = vsel %vm1693, %v1677, %v1709
        %v1726 = vsel %vm1694, %v1678, %v1710
        %v1727 = vsel %vm1695, %v1679, %v1711
        %v1728 = vsel %vm1696, %v1680, %v1712
        %v1729 = vsel %vm1697, %v1681, %v1713
        %v1730 = vsel %vm1698, %v1682, %v1714
        %v1731 = vsel %vm1699, %v1683, %v1715
        %v1732 = vsel %vm886, %v1716, -1e+30
        %v1733 = vsel %vm887, %v1717, -1e+30
        %v1734 = vsel %vm888, %v1718, -1e+30
        %v1735 = vsel %vm889, %v1719, -1e+30
        %v1736 = vsel %vm890, %v1720, -1e+30
        %v1737 = vsel %vm891, %v1721, -1e+30
        %v1738 = vsel %vm892, %v1722, -1e+30
        %v1739 = vsel %vm893, %v1723, -1e+30
        %v1740 = vsel %vm894, %v1724, -1e+30
        %v1741 = vsel %vm895, %v1725, -1e+30
        %v1742 = vsel %vm896, %v1726, -1e+30
        %v1743 = vsel %vm897, %v1727, -1e+30
        %v1744 = vsel %vm898, %v1728, -1e+30
        %v1745 = vsel %vm899, %v1729, -1e+30
        %v1746 = vsel %vm900, %v1730, -1e+30
        %v1747 = vsel %vm901, %v1731, -1e+30
        %1748 = vmax.xlane.f32.xlu0 %v1732
        %v1749 = vpop.xlane.xlu0 %1748
        %1750 = vmax.xlane.f32.xlu0 %v1733
        %v1751 = vpop.xlane.xlu0 %1750
        %1752 = vmax.xlane.f32.xlu0 %v1734
        %v1753 = vpop.xlane.xlu0 %1752
        %1754 = vmax.xlane.f32.xlu0 %v1735
        %v1755 = vpop.xlane.xlu0 %1754
        %1756 = vmax.xlane.f32.xlu0 %v1736
        %v1757 = vpop.xlane.xlu0 %1756
        %1758 = vmax.xlane.f32.xlu0 %v1737
        %v1759 = vpop.xlane.xlu0 %1758
        %1760 = vmax.xlane.f32.xlu0 %v1738
        %v1761 = vpop.xlane.xlu0 %1760
        %1762 = vmax.xlane.f32.xlu0 %v1739
        %v1763 = vpop.xlane.xlu0 %1762
        %1764 = vmax.xlane.f32.xlu0 %v1740
        %v1765 = vpop.xlane.xlu0 %1764
        %1766 = vmax.xlane.f32.xlu0 %v1741
        %v1767 = vpop.xlane.xlu0 %1766
        %1768 = vmax.xlane.f32.xlu0 %v1742
        %v1769 = vpop.xlane.xlu0 %1768
        %1770 = vmax.xlane.f32.xlu0 %v1743
        %v1771 = vpop.xlane.xlu0 %1770
        %1772 = vmax.xlane.f32.xlu0 %v1744
        %v1773 = vpop.xlane.xlu0 %1772
        %1774 = vmax.xlane.f32.xlu0 %v1745
        %v1775 = vpop.xlane.xlu0 %1774
        %1776 = vmax.xlane.f32.xlu0 %v1746
        %v1777 = vpop.xlane.xlu0 %1776
        %1778 = vmax.xlane.f32.xlu0 %v1747
        %v1779 = vpop.xlane.xlu0 %1778
        %v1780 = vsub.f32 %v1732, %v1749
        %v1781 = vsub.f32 %v1733, %v1751
        %v1782 = vsub.f32 %v1734, %v1753
        %v1783 = vsub.f32 %v1735, %v1755
        %v1784 = vsub.f32 %v1736, %v1757
        %v1785 = vsub.f32 %v1737, %v1759
        %v1786 = vsub.f32 %v1738, %v1761
        %v1787 = vsub.f32 %v1739, %v1763
        %v1788 = vsub.f32 %v1740, %v1765
        %v1789 = vsub.f32 %v1741, %v1767
        %v1790 = vsub.f32 %v1742, %v1769
        %v1791 = vsub.f32 %v1743, %v1771
        %v1792 = vsub.f32 %v1744, %v1773
        %v1793 = vsub.f32 %v1745, %v1775
        %v1794 = vsub.f32 %v1746, %v1777
        %v1795 = vsub.f32 %v1747, %v1779
        %v1796 = vmul.f32 %v1780, 1.442695
        %v1797 = vpow.pop %v1796
        %v1798 = vmul.f32 %v1781, 1.442695
        %v1799 = vpow.pop %v1798
        %v1800 = vmul.f32 %v1782, 1.442695
        %v1801 = vpow.pop %v1800
        %v1802 = vmul.f32 %v1783, 1.442695
        %v1803 = vpow.pop %v1802
        %v1804 = vmul.f32 %v1784, 1.442695
        %v1805 = vpow.pop %v1804
        %v1806 = vmul.f32 %v1785, 1.442695
        %v1807 = vpow.pop %v1806
        %v1808 = vmul.f32 %v1786, 1.442695
        %v1809 = vpow.pop %v1808
        %v1810 = vmul.f32 %v1787, 1.442695
        %v1811 = vpow.pop %v1810
        %v1812 = vmul.f32 %v1788, 1.442695
        %v1813 = vpow.pop %v1812
        %v1814 = vmul.f32 %v1789, 1.442695
        %v1815 = vpow.pop %v1814
        %v1816 = vmul.f32 %v1790, 1.442695
        %v1817 = vpow.pop %v1816
        %v1818 = vmul.f32 %v1791, 1.442695
        %v1819 = vpow.pop %v1818
        %v1820 = vmul.f32 %v1792, 1.442695
        %v1821 = vpow.pop %v1820
        %v1822 = vmul.f32 %v1793, 1.442695
        %v1823 = vpow.pop %v1822
        %v1824 = vmul.f32 %v1794, 1.442695
        %v1825 = vpow.pop %v1824
        %v1826 = vmul.f32 %v1795, 1.442695
        %v1827 = vpow.pop %v1826
        %v1828 = vsel %vm886, %v1797, 0.0
        %v1829 = vsel %vm887, %v1799, 0.0
        %v1830 = vsel %vm888, %v1801, 0.0
        %v1831 = vsel %vm889, %v1803, 0.0
        %v1832 = vsel %vm890, %v1805, 0.0
        %v1833 = vsel %vm891, %v1807, 0.0
        %v1834 = vsel %vm892, %v1809, 0.0
        %v1835 = vsel %vm893, %v1811, 0.0
        %v1836 = vsel %vm894, %v1813, 0.0
        %v1837 = vsel %vm895, %v1815, 0.0
        %v1838 = vsel %vm896, %v1817, 0.0
        %v1839 = vsel %vm897, %v1819, 0.0
        %v1840 = vsel %vm898, %v1821, 0.0
        %v1841 = vsel %vm899, %v1823, 0.0
        %v1842 = vsel %vm900, %v1825, 0.0
        %v1843 = vsel %vm901, %v1827, 0.0
        %1844 = vadd.xlane.f32.xlu0 %v1828
        %v1845 = vpop.xlane.xlu0 %1844
        %1846 = vadd.xlane.f32.xlu0 %v1829
        %v1847 = vpop.xlane.xlu0 %1846
        %1848 = vadd.xlane.f32.xlu0 %v1830
        %v1849 = vpop.xlane.xlu0 %1848
        %1850 = vadd.xlane.f32.xlu0 %v1831
        %v1851 = vpop.xlane.xlu0 %1850
        %1852 = vadd.xlane.f32.xlu0 %v1832
        %v1853 = vpop.xlane.xlu0 %1852
        %1854 = vadd.xlane.f32.xlu0 %v1833
        %v1855 = vpop.xlane.xlu0 %1854
        %1856 = vadd.xlane.f32.xlu0 %v1834
        %v1857 = vpop.xlane.xlu0 %1856
        %1858 = vadd.xlane.f32.xlu0 %v1835
        %v1859 = vpop.xlane.xlu0 %1858
        %1860 = vadd.xlane.f32.xlu0 %v1836
        %v1861 = vpop.xlane.xlu0 %1860
        %1862 = vadd.xlane.f32.xlu0 %v1837
        %v1863 = vpop.xlane.xlu0 %1862
        %1864 = vadd.xlane.f32.xlu0 %v1838
        %v1865 = vpop.xlane.xlu0 %1864
        %1866 = vadd.xlane.f32.xlu0 %v1839
        %v1867 = vpop.xlane.xlu0 %1866
        %1868 = vadd.xlane.f32.xlu0 %v1840
        %v1869 = vpop.xlane.xlu0 %1868
        %1870 = vadd.xlane.f32.xlu0 %v1841
        %v1871 = vpop.xlane.xlu0 %1870
        %1872 = vadd.xlane.f32.xlu0 %v1842
        %v1873 = vpop.xlane.xlu0 %1872
        %1874 = vadd.xlane.f32.xlu0 %v1843
        %v1875 = vpop.xlane.xlu0 %1874
        %vm1876 = vcmp.gt.f32.partialorder %v1845, 0.0
        %vm1877 = vcmp.gt.f32.partialorder %v1847, 0.0
        %vm1878 = vcmp.gt.f32.partialorder %v1849, 0.0
        %vm1879 = vcmp.gt.f32.partialorder %v1851, 0.0
        %vm1880 = vcmp.gt.f32.partialorder %v1853, 0.0
        %vm1881 = vcmp.gt.f32.partialorder %v1855, 0.0
        %vm1882 = vcmp.gt.f32.partialorder %v1857, 0.0
        %vm1883 = vcmp.gt.f32.partialorder %v1859, 0.0
        %vm1884 = vcmp.gt.f32.partialorder %v1861, 0.0
        %vm1885 = vcmp.gt.f32.partialorder %v1863, 0.0
        %vm1886 = vcmp.gt.f32.partialorder %v1865, 0.0
        %vm1887 = vcmp.gt.f32.partialorder %v1867, 0.0
        %vm1888 = vcmp.gt.f32.partialorder %v1869, 0.0
        %vm1889 = vcmp.gt.f32.partialorder %v1871, 0.0
        %vm1890 = vcmp.gt.f32.partialorder %v1873, 0.0
        %vm1891 = vcmp.gt.f32.partialorder %v1875, 0.0
        %v1892 = vsel %vm1876, %v1845, 1.0
        %v1893 = vsel %vm1877, %v1847, 1.0
        %v1894 = vsel %vm1878, %v1849, 1.0
        %v1895 = vsel %vm1879, %v1851, 1.0
        %v1896 = vsel %vm1880, %v1853, 1.0
        %v1897 = vsel %vm1881, %v1855, 1.0
        %v1898 = vsel %vm1882, %v1857, 1.0
        %v1899 = vsel %vm1883, %v1859, 1.0
        %v1900 = vsel %vm1884, %v1861, 1.0
        %v1901 = vsel %vm1885, %v1863, 1.0
        %v1902 = vsel %vm1886, %v1865, 1.0
        %v1903 = vsel %vm1887, %v1867, 1.0
        %v1904 = vsel %vm1888, %v1869, 1.0
        %v1905 = vsel %vm1889, %v1871, 1.0
        %v1906 = vsel %vm1890, %v1873, 1.0
        %v1907 = vsel %vm1891, %v1875, 1.0
        %v1908 = vrcp.pop %v1892
        %v1909 = vrcp.pop %v1893
        %v1910 = vrcp.pop %v1894
        %v1911 = vrcp.pop %v1895
        %v1912 = vrcp.pop %v1896
        %v1913 = vrcp.pop %v1897
        %v1914 = vrcp.pop %v1898
        %v1915 = vrcp.pop %v1899
        %v1916 = vrcp.pop %v1900
        %v1917 = vrcp.pop %v1901
        %v1918 = vrcp.pop %v1902
        %v1919 = vrcp.pop %v1903
        %v1920 = vrcp.pop %v1904
        %v1921 = vrcp.pop %v1905
        %v1922 = vrcp.pop %v1906
        %v1923 = vrcp.pop %v1907
        %v1924 = vmul.f32 %v1828, %v1908
        %v1925 = vmul.f32 %v1829, %v1909
        %v1926 = vmul.f32 %v1830, %v1910
        %v1927 = vmul.f32 %v1831, %v1911
        %v1928 = vmul.f32 %v1832, %v1912
        %v1929 = vmul.f32 %v1833, %v1913
        %v1930 = vmul.f32 %v1834, %v1914
        %v1931 = vmul.f32 %v1835, %v1915
        %v1932 = vmul.f32 %v1836, %v1916
        %v1933 = vmul.f32 %v1837, %v1917
        %v1934 = vmul.f32 %v1838, %v1918
        %v1935 = vmul.f32 %v1839, %v1919
        %v1936 = vmul.f32 %v1840, %v1920
        %v1937 = vmul.f32 %v1841, %v1921
        %v1938 = vmul.f32 %v1842, %v1922
        %v1939 = vmul.f32 %v1843, %v1923
        %v1940 = vpack.c.bf16 %v1925, %v1924
        %v1941 = vpack.c.bf16 %v1927, %v1926
        %v1942 = vpack.c.bf16 %v1929, %v1928
        %v1943 = vpack.c.bf16 %v1931, %v1930
        %v1944 = vpack.c.bf16 %v1933, %v1932
        %v1945 = vpack.c.bf16 %v1935, %v1934
        %v1946 = vpack.c.bf16 %v1937, %v1936
        %v1947 = vpack.c.bf16 %v1939, %v1938
        %v1956 = vunpack.c.l.b16 %v1940
        %v1957 = vunpack.c.h.b16 %v1940
        %v1958 = vunpack.c.l.b16 %v1941
        %v1959 = vunpack.c.h.b16 %v1941
        %v1960 = vunpack.c.l.b16 %v1942
        %v1961 = vunpack.c.h.b16 %v1942
        %v1962 = vunpack.c.l.b16 %v1943
        %v1963 = vunpack.c.h.b16 %v1943
        %v1964 = vunpack.c.l.b16 %v1944
        %v1965 = vunpack.c.h.b16 %v1944
        %v1966 = vunpack.c.l.b16 %v1945
        %v1967 = vunpack.c.h.b16 %v1945
        %v1968 = vunpack.c.l.b16 %v1946
        %v1969 = vunpack.c.h.b16 %v1946
        %v1970 = vunpack.c.l.b16 %v1947
        %v1971 = vunpack.c.h.b16 %v1947
        %v1972 = vpack.c.b16 %v1956, %v1956
        %v1973 = vpack.c.b16 %v1957, %v1957
        %v1974 = vpack.c.b16 %v1958, %v1958
        %v1975 = vpack.c.b16 %v1959, %v1959
        %v1976 = vpack.c.b16 %v1960, %v1960
        %v1977 = vpack.c.b16 %v1961, %v1961
        %v1978 = vpack.c.b16 %v1962, %v1962
        %v1979 = vpack.c.b16 %v1963, %v1963
        %v1980 = vpack.c.b16 %v1964, %v1964
        %v1981 = vpack.c.b16 %v1965, %v1965
        %v1982 = vpack.c.b16 %v1966, %v1966
        %v1983 = vpack.c.b16 %v1967, %v1967
        %v1984 = vpack.c.b16 %v1968, %v1968
        %v1985 = vpack.c.b16 %v1969, %v1969
        %v1986 = vpack.c.b16 %v1970, %v1970
        %v1987 = vpack.c.b16 %v1971, %v1971
        %s2004 = scalar_lea.vmem %s361, 64 [#allocation9]
        %2005 = vst [vmem:[%s2004] sm:$0xf] %v1972
        %2006 = vst [vmem:[%s2004 + $0x4] sm:$0xf] %v1973
        %2007 = vst [vmem:[%s2004 + $0x8] sm:$0xf] %v1974
        %2008 = vst [vmem:[%s2004 + $0xc] sm:$0xf] %v1975
        %2009 = vst [vmem:[%s2004 + $0x10] sm:$0xf] %v1976
        %2010 = vst [vmem:[%s2004 + $0x14] sm:$0xf] %v1977
        %2011 = vst [vmem:[%s2004 + $0x18] sm:$0xf] %v1978
        %2012 = vst [vmem:[%s2004 + $0x1c] sm:$0xf] %v1979
        %2013 = vst [vmem:[%s2004 + $0x20] sm:$0xf] %v1980
        %2014 = vst [vmem:[%s2004 + $0x24] sm:$0xf] %v1981
        %2015 = vst [vmem:[%s2004 + $0x28] sm:$0xf] %v1982
        %2016 = vst [vmem:[%s2004 + $0x2c] sm:$0xf] %v1983
        %2017 = vst [vmem:[%s2004 + $0x30] sm:$0xf] %v1984
        %2018 = vst [vmem:[%s2004 + $0x34] sm:$0xf] %v1985
        %2019 = vst [vmem:[%s2004 + $0x38] sm:$0xf] %v1986
        %2020 = vst [vmem:[%s2004 + $0x3c] sm:$0xf] %v1987
        %v2021 = vpack.c.bf16 %v1445, %v1442
        %v2022 = vpack.c.bf16 %v1453, %v1450
        %v2023 = vpack.c.bf16 %v1461, %v1458
        %v2024 = vpack.c.bf16 %v1469, %v1466
        %v2025 = vpack.c.bf16 %v1477, %v1474
        %v2026 = vpack.c.bf16 %v1485, %v1482
        %v2027 = vpack.c.bf16 %v1493, %v1490
        %v2028 = vpack.c.bf16 %v1501, %v1498
        %s2029 = scalar_lea.vmem %s5, 1
        %v2030 = vld [vmem:[%s2029] sm:$0x1]
        %v2032 = vlaneseq
        %v2033 = vshrl.u32 %v2032, 7
        %v2034 = vsub.s32 0, %v2033
        %v2035 = vrot.slane %v2030, %v2034
        %2037 = vmatprep.subr.bf16.mxu0 0
        %2038 = vmatpush1.bf16.msra.mxu0 %v2028
        %2039 = vmatprep.subr.bf16.mxu0 0
        %2040 = vmatpush1.bf16.msra.mxu0 %v2027
        %2041 = vmatprep.subr.bf16.mxu0 0
        %2042 = vmatpush1.bf16.msra.mxu0 %v2026
        %2043 = vmatprep.subr.bf16.mxu0 0
        %2044 = vmatpush1.bf16.msra.mxu0 %v2025
        %2045 = vmatprep.subr.bf16.mxu0 0
        %2046 = vmatpush1.bf16.msra.mxu0 %v2024
        %2047 = vmatprep.subr.bf16.mxu0 0
        %2048 = vmatpush1.bf16.msra.mxu0 %v2023
        %2049 = vmatprep.subr.bf16.mxu0 0
        %2050 = vmatpush1.bf16.msra.mxu0 %v2022
        %2051 = vmatprep.subr.bf16.mxu0 0
        %2052 = vmatpush1.bf16.msra.mxu0 %v2021
        %2053 = vmatprep.subr.bf16.mxu0 0
        %2054 = vmatpush2.bf16.msra.mxu0 0
        %2055 = vmatprep.subr.bf16.mxu0 0
        %2056 = vmatpush2.bf16.msra.mxu0 0
        %2057 = vmatprep.subr.bf16.mxu0 0
        %2058 = vmatpush2.bf16.msra.mxu0 0
        %2059 = vmatprep.subr.bf16.mxu0 0
        %2060 = vmatpush2.bf16.msra.mxu0 0
        %2061 = vmatprep.subr.bf16.mxu0 0
        %2062 = vmatpush2.bf16.msra.mxu0 0
        %2063 = vmatprep.subr.bf16.mxu0 0
        %2064 = vmatpush2.bf16.msra.mxu0 0
        %2065 = vmatprep.subr.bf16.mxu0 0
        %2066 = vmatpush2.bf16.msra.mxu0 0
        %2067 = vmatprep.subr.bf16.mxu0 0
        %2068 = vmatpush2.bf16.msra.mxu0 0
        %2069 = vmatprep.mubr.bf16.mxu0 0
        %2070 = vmatmul.mubr.bf16.gmra.mxu0 %v1940
        %v2071 = vpop.f32.mrf.mxu0
        %v2072 = vadd.f32 %v2035, %v2071
        %v2073 = vpop.f32.mrf.mxu0
        %v2074 = vpop.f32.mrf.mxu0
        %v2075 = vadd.f32 %v2035, %v2074
        %v2076 = vpop.f32.mrf.mxu0
        %2077 = vmatprep.mubr.bf16.mxu0 0
        %2078 = vmatmul.mubr.bf16.gmra.mxu0 %v1941
        %v2079 = vpop.f32.mrf.mxu0
        %v2080 = vadd.f32 %v2035, %v2079
        %v2081 = vpop.f32.mrf.mxu0
        %v2082 = vpop.f32.mrf.mxu0
        %v2083 = vadd.f32 %v2035, %v2082
        %v2084 = vpop.f32.mrf.mxu0
        %2085 = vmatprep.mubr.bf16.mxu0 0
        %2086 = vmatmul.mubr.bf16.gmra.mxu0 %v1942
        %v2087 = vpop.f32.mrf.mxu0
        %v2088 = vadd.f32 %v2035, %v2087
        %v2089 = vpop.f32.mrf.mxu0
        %v2090 = vpop.f32.mrf.mxu0
        %v2091 = vadd.f32 %v2035, %v2090
        %v2092 = vpop.f32.mrf.mxu0
        %2093 = vmatprep.mubr.bf16.mxu0 0
        %2094 = vmatmul.mubr.bf16.gmra.mxu0 %v1943
        %v2095 = vpop.f32.mrf.mxu0
        %v2096 = vadd.f32 %v2035, %v2095
        %v2097 = vpop.f32.mrf.mxu0
        %v2098 = vpop.f32.mrf.mxu0
        %v2099 = vadd.f32 %v2035, %v2098
        %v2100 = vpop.f32.mrf.mxu0
        %2101 = vmatprep.mubr.bf16.mxu0 0
        %2102 = vmatmul.mubr.bf16.gmra.mxu0 %v1944
        %v2103 = vpop.f32.mrf.mxu0
        %v2104 = vadd.f32 %v2035, %v2103
        %v2105 = vpop.f32.mrf.mxu0
        %v2106 = vpop.f32.mrf.mxu0
        %v2107 = vadd.f32 %v2035, %v2106
        %v2108 = vpop.f32.mrf.mxu0
        %2109 = vmatprep.mubr.bf16.mxu0 0
        %2110 = vmatmul.mubr.bf16.gmra.mxu0 %v1945
        %v2111 = vpop.f32.mrf.mxu0
        %v2112 = vadd.f32 %v2035, %v2111
        %v2113 = vpop.f32.mrf.mxu0
        %v2114 = vpop.f32.mrf.mxu0
        %v2115 = vadd.f32 %v2035, %v2114
        %v2116 = vpop.f32.mrf.mxu0
        %2117 = vmatprep.mubr.bf16.mxu0 0
        %2118 = vmatmul.mubr.bf16.gmra.mxu0 %v1946
        %v2119 = vpop.f32.mrf.mxu0
        %v2120 = vadd.f32 %v2035, %v2119
        %v2121 = vpop.f32.mrf.mxu0
        %v2122 = vpop.f32.mrf.mxu0
        %v2123 = vadd.f32 %v2035, %v2122
        %v2124 = vpop.f32.mrf.mxu0
        %2125 = vmatprep.mubr.bf16.mxu0 0
        %2126 = vmatmul.mubr.bf16.gmra.mxu0 %v1947
        %v2127 = vpop.f32.mrf.mxu0
        %v2128 = vadd.f32 %v2035, %v2127
        %v2129 = vpop.f32.mrf.mxu0
        %v2130 = vpop.f32.mrf.mxu0
        %v2131 = vadd.f32 %v2035, %v2130
        %v2132 = vpop.f32.mrf.mxu0
        %2133 = vdwg.mxu0
        %v2134 = vadd.f32 %v1318, %v2072
        %v2135 = vadd.f32 %v1319, %v2075
        %v2136 = vadd.f32 %v1320, %v2080
        %v2137 = vadd.f32 %v1321, %v2083
        %v2138 = vadd.f32 %v1322, %v2088
        %v2139 = vadd.f32 %v1323, %v2091
        %v2140 = vadd.f32 %v1324, %v2096
        %v2141 = vadd.f32 %v1325, %v2099
        %v2142 = vadd.f32 %v1326, %v2104
        %v2143 = vadd.f32 %v1327, %v2107
        %v2144 = vadd.f32 %v1328, %v2112
        %v2145 = vadd.f32 %v1329, %v2115
        %v2146 = vadd.f32 %v1330, %v2120
        %v2147 = vadd.f32 %v1331, %v2123
        %v2148 = vadd.f32 %v1332, %v2128
        %v2149 = vadd.f32 %v1333, %v2131
        %2150 = vst [vmem:[%s354] sm:$0xff] %v2134
        %2151 = vst [vmem:[%s354 + $0x8] sm:$0xff] %v2135
        %2152 = vst [vmem:[%s354 + $0x10] sm:$0xff] %v2136
        %2153 = vst [vmem:[%s354 + $0x18] sm:$0xff] %v2137
        %2154 = vst [vmem:[%s354 + $0x20] sm:$0xff] %v2138
        %2155 = vst [vmem:[%s354 + $0x28] sm:$0xff] %v2139
        %2156 = vst [vmem:[%s354 + $0x30] sm:$0xff] %v2140
        %2157 = vst [vmem:[%s354 + $0x38] sm:$0xff] %v2141
        %2158 = vst [vmem:[%s354 + $0x40] sm:$0xff] %v2142
        %2159 = vst [vmem:[%s354 + $0x48] sm:$0xff] %v2143
        %2160 = vst [vmem:[%s354 + $0x50] sm:$0xff] %v2144
        %2161 = vst [vmem:[%s354 + $0x58] sm:$0xff] %v2145
        %2162 = vst [vmem:[%s354 + $0x60] sm:$0xff] %v2146
        %2163 = vst [vmem:[%s354 + $0x68] sm:$0xff] %v2147
        %2164 = vst [vmem:[%s354 + $0x70] sm:$0xff] %v2148
        %2165 = vst [vmem:[%s354 + $0x78] sm:$0xff] %v2149
        %s2166 = sand.u32 %s175, 1
        %s2167 = scalar_lea.sflag [#allocation4], %s2166
        %s2168 = sand.u32 %s175, 1
        %s2169 = smul.addr %s2168, 128
        %s2170 = scalar_lea.vmem [#allocation8], %s2169
        %s2171 = sand.u32 %s201, 1
        %s2172 = scalar_lea.sflag [#allocation10], %s2171
        %s2173 = sand.u32 %s201, 1
        %s2174 = smul.addr %s2173, 128
        %s2175 = scalar_lea.vmem [#allocation9], %s2174
        // Predicated region
        $region57: #{tpu_custom_call.1} parent=43 // pred_check
          %p2176 = pneg %p185
        $region58: #{tpu_custom_call.1} parent=43 // pred_check_branch
          %2178 = sbr.rel (%p2176) target = $region60
        $region59: #{tpu_custom_call.1} parent=43 // pred_region
          %s2180 = ssub.s32 2048, 2048
          %2181 = vsyncadd %s2167, %s2180
          %s2182 = smul.addr %s31, 16
          %s2183 = smul.addr %s2182, 128
          %s2184 = scalar_lea.hbm %s6, %s2183
          %s2185 = sshll.u32 %s2170, 4
          %s2186 = int_to_ptr.vmem [resolvable:$true] %s2185
          %2191 = dma.vmem_to_hbm [thread:$0]  %s2186, 2048, %s2184, %s2167, 128, 128, 8
        $region60: #{tpu_custom_call.1} parent=43 // pred_fallthru
          _
        // Predicated region
        $region61: #{tpu_custom_call.1} parent=43 // pred_check
          %p2192 = pneg %p211
        $region62: #{tpu_custom_call.1} parent=43 // pred_check_branch
          %2194 = sbr.rel (%p2192) target = $region64
        $region63: #{tpu_custom_call.1} parent=43 // pred_region
          %s2196 = ssub.s32 2048, 2048
          %2197 = vsyncadd %s2172, %s2196
          %s2198 = smul.addr %s31, 32
          %s2199 = smul.addr %s2198, 64
          %s2200 = scalar_lea.hbm %s7, %s2199
          %s2201 = sshll.u32 %s2175, 4
          %s2202 = int_to_ptr.vmem [resolvable:$true] %s2201
          %2207 = dma.vmem_to_hbm [thread:$0]  %s2202, 2048, %s2200, %s2172, 64, 64, 4
        $region64: #{tpu_custom_call.1} parent=43 // pred_fallthru
          _
      $region44: #{tpu_custom_call.1} parent=5 // pred_fallthru
        _
      %p2208 = scmp.le.s32.totalorder 2, %s26
      // Predicated region
      $region65: #{tpu_custom_call.1} parent=5 // pred_check
        %p2209 = pneg %p2208
      $region66: #{tpu_custom_call.1} parent=5 // pred_check_branch
        %2211 = sbr.rel (%p2209) target = $region68
      $region67: #{tpu_custom_call.1} parent=5 // pred_region
        %s2212 = ssub.s32 %s26, 2
        // Predicated region
        $region69: #{tpu_custom_call.1} parent=67 // pred_check
          %p2213 = pneg %p191
        $region70: #{tpu_custom_call.1} parent=67 // pred_check_branch
          %2215 = sbr.rel (%p2213) target = $region72
        $region71: #{tpu_custom_call.1} parent=67 // pred_region
          %s2216 = sand.u32 %s176, 1
          %s2217 = scalar_lea.sflag [#allocation4], %s2216
          %s2218 = sand.u32 %s176, 1
          %s2219 = smul.addr %s2218, 128
          %s2220 = scalar_lea.vmem [#allocation8], %s2219
          %2221 = dma.done %s2217, 2048
        $region72: #{tpu_custom_call.1} parent=67 // pred_fallthru
          _
        // Predicated region
        $region73: #{tpu_custom_call.1} parent=67 // pred_check
          %p2222 = pneg %p217
        $region74: #{tpu_custom_call.1} parent=67 // pred_check_branch
          %2224 = sbr.rel (%p2222) target = $region76
        $region75: #{tpu_custom_call.1} parent=67 // pred_region
          %s2225 = sand.u32 %s202, 1
          %s2226 = scalar_lea.sflag [#allocation10], %s2225
          %s2227 = sand.u32 %s202, 1
          %s2228 = smul.addr %s2227, 128
          %s2229 = scalar_lea.vmem [#allocation9], %s2228
          %2230 = dma.done %s2226, 2048
        $region76: #{tpu_custom_call.1} parent=67 // pred_fallthru
          _
      $region68: #{tpu_custom_call.1} parent=5 // pred_fallthru
        _
    $region6: #{tpu_custom_call.1} parent=1 // loop_footer
      %s30 = sadd.s32 1, %s26
    $region7: #{tpu_custom_call.1} parent=1 // loop_footer_branch
      %25 = sbr.rel target = $region3
    $region8: #{tpu_custom_call.1} parent=1 // loop_exit
      _
    %2231 = vsyncpa [#allocation3], 1
    %s2232 = scalar_lea.sflag [#allocation3], 1
    %2233 = vsyncpa %s2232, 1
    %2234 = vsyncpa [#allocation6], 1
    %s2235 = scalar_lea.sflag [#allocation6], 1
    %2236 = vsyncpa %s2235, 1
    %2237 = vsyncpa [#allocation4], 1
    %s2238 = scalar_lea.sflag [#allocation4], 1
    %2239 = vsyncpa %s2238, 1
    %2240 = vsyncpa [#allocation10], 1
    %s2241 = scalar_lea.sflag [#allocation10], 1
    %2242 = vsyncpa %s2241, 1

</llo_original>
